<compile_context>
chip_gen: v7x
topology: tpu7x:2x2x1
jax: 0.10.0
libtpu: 0.0.40
codegen_flags: <defaults>
</compile_context>

<pallas_src>
import functools
import numpy as np

import jax
import jax.numpy as jnp
from jax import lax
from jax.experimental import pallas as pl
from jax.experimental.pallas import tpu as pltpu


PAD1 = 4          # conv1: 9x9, padding=4
PAD3 = 2          # conv3: 5x5, padding=2
K1 = 9
K3 = 5
C_IN = 3
C1 = 64
C2 = 32
K1_FLAT = 256     # 3*9*9 = 243 -> zero padded to 256 (full MXU depth)
K3_FLAT = C2 * K3 * K3   # 800


# ---------------------------------------------------------------------------
# Bicubic resize matrices (exact PyTorch bicubic, align_corners=False, A=-0.75)
# ---------------------------------------------------------------------------
def _cubic_coeffs(t, A=-0.75):
    t = np.asarray(t, dtype=np.float64)

    def c1(x):  # |x| <= 1
        return ((A + 2.0) * x - (A + 3.0)) * x * x + 1.0

    def c2(x):  # 1 < |x| < 2
        return ((A * x - 5.0 * A) * x + 8.0 * A) * x - 4.0 * A

    return np.stack([c2(t + 1.0), c1(t), c1(1.0 - t), c2(2.0 - t)], axis=-1)


def make_resize_matrix(in_size, scale):
    """Dense (out_size, in_size) matrix implementing 1-D PyTorch bicubic resize."""
    out_size = int(np.floor(in_size * scale))
    rscale = 1.0 / scale                      # scale_factor path of interpolate
    dst = np.arange(out_size, dtype=np.float64)
    src = rscale * (dst + 0.5) - 0.5          # pytorch_half_pixel
    i0 = np.floor(src).astype(np.int64)
    t = src - i0
    w = _cubic_coeffs(t)                      # (out, 4)
    M = np.zeros((out_size, in_size), dtype=np.float64)
    for k in range(4):
        idx = np.clip(i0 - 1 + k, 0, in_size - 1)   # border replication
        np.add.at(M, (np.arange(out_size), idx), w[:, k])
    return jnp.asarray(M, dtype=jnp.float32)


# ---------------------------------------------------------------------------
# Kernel 1: fused bicubic resize + pad + conv1(9x9) + ReLU + conv2(1x1) + ReLU
# ---------------------------------------------------------------------------
def _resize_conv12_kernel(x_ref, rh_ref, rwT_ref, w1_ref, b1_ref, w2_ref, b2_ref,
                          o_ref, xp_s, p1_s):
    # x_ref : (1, 3, H, W)        original low-res image
    # rh_ref: (Hout, H)           height resize matrix
    # rwT_ref: (W, Wout)          width resize matrix (transposed)
    # w1_ref: (64, 256)           conv1 weights, im2col order j = ci*81+kw*9+kh
    # w2_ref: (32, 64)            conv2 1x1 weights
    # o_ref : (1, Ho2p, 32, Wo2p) conv2 output, row-major, pre-padded for conv3
    # xp_s  : VMEM (3, Hp, Wp)    padded upsampled image (planar, W on lanes)
    # p1_s  : VMEM (256, Wout)    im2col patch for one output row
    Hout = rh_ref.shape[0]
    Wout = rwT_ref.shape[1]

    # Zero once: conv1 zero-padding border, unused patch rows (243..255) and
    # the conv3 zero-padding border of the output.
    xp_s[...] = jnp.zeros_like(xp_s)
    p1_s[...] = jnp.zeros_like(p1_s)
    o_ref[...] = jnp.zeros_like(o_ref)

    # ---- stage 1: bicubic upsample straight into the padded planar scratch.
    for c in range(C_IN):
        t = jnp.dot(x_ref[0, c], rwT_ref[...], preferred_element_type=jnp.float32)
        plane = jnp.dot(rh_ref[...], t, preferred_element_type=jnp.float32)
        xp_s[c, PAD1:PAD1 + Hout, PAD1:PAD1 + Wout] = plane

    # ---- stage 2: per output row, im2col conv1 (K = 243 -> 256) + ReLU,
    #      then the 1x1 conv2 + ReLU on the accumulator while it is in VMEM.
    def _row(h, carry):
        # Build the (256, Wout) patch: 27 contiguous 9-row copies.
        for ci in range(C_IN):
            for kw in range(K1):
                base = ci * (K1 * K1) + kw * K1
                p1_s[base:base + K1, :] = xp_s[ci, pl.ds(h, K1), kw:kw + Wout]
        a1 = jnp.dot(w1_ref[...], p1_s[...], preferred_element_type=jnp.float32)
        a1 = jnp.maximum(a1 + b1_ref[...], 0.0)                    # (64, Wout)
        a2 = jnp.dot(w2_ref[...], a1, preferred_element_type=jnp.float32)
        a2 = jnp.maximum(a2 + b2_ref[...], 0.0)                    # (32, Wout)
        o_ref[0, PAD3 + h, :, PAD3:PAD3 + Wout] = a2
        return carry

    lax.fori_loop(0, Hout, _row, 0)


# ---------------------------------------------------------------------------
# Kernel 2: conv3 (5x5, 32 -> 3), direct NCHW output, 8 rows per grid step
# ---------------------------------------------------------------------------
def _conv3_kernel(c2_ref, w3_ref, b3_ref, o_ref, p3_s, *, Hout):
    # c2_ref: (1, Ho2p, 32, Wo2p)  row-major conv2 output (pre-padded)
    # w3_ref: (3, 800)             conv3 weights, j = (kh*5+kw)*32 + ci
    # o_ref : (1, 3, 8, Wout)      8 NCHW output rows
    Wout = o_ref.shape[3]
    rblk = pl.program_id(1)
    for rr in range(8):
        h = jnp.minimum(rblk * 8 + rr, Hout - 1)   # clamp for a ragged tail block
        for kh in range(K3):
            for kw in range(K3):
                t = kh * K3 + kw
                p3_s[t * C2:(t + 1) * C2, :] = c2_ref[0, h + kh, :, kw:kw + Wout]
        a3 = jnp.dot(w3_ref[...], p3_s[...], preferred_element_type=jnp.float32)
        a3 = a3 + b3_ref[...]                       # (3, Wout)
        for c in range(C_IN):
            o_ref[0, c, rr:rr + 1, :] = a3[c:c + 1, :]


# ---------------------------------------------------------------------------
# Wrapper
# ---------------------------------------------------------------------------
def strange_super_resolution_net(x_nchw, upscale_factor, params):
    """x_nchw: (N, 3, H, W) float32; upscale_factor: 4-vector like the torch tensor."""
    scales = [float(s) for s in np.asarray(upscale_factor).tolist()[-2:]]
    sh, sw = scales
    N, C, H, W = x_nchw.shape
    assert C == C_IN

    Rh = make_resize_matrix(H, sh)          # (Hout, H)
    Rw = make_resize_matrix(W, sw)          # (Wout, W)
    Hout, Wout = Rh.shape[0], Rw.shape[0]
    RwT = jnp.transpose(Rw)                 # (W, Wout)

    # Flatten torch-OIHW weights into the matmul layouts used by the kernels.
    w1f = jnp.transpose(params["w1"], (0, 1, 3, 2)).reshape(C1, C_IN * K1 * K1)
    w1f = jnp.pad(w1f, ((0, 0), (0, K1_FLAT - C_IN * K1 * K1)))      # (64, 256)
    b1 = params["b1"].reshape(C1, 1)
    w2f = params["w2"].reshape(C2, C1)                               # (32, 64)
    b2 = params["b2"].reshape(C2, 1)
    w3f = jnp.transpose(params["w3"], (0, 2, 3, 1)).reshape(C_IN, K3_FLAT)  # (3, 800)
    b3 = params["b3"].reshape(C_IN, 1)

    Hp, Wp = Hout + 2 * PAD1, Wout + 2 * PAD1
    Ho2p, Wo2p = Hout + 2 * PAD3, Wout + 2 * PAD3

    # ---- fused resize + pad + conv1 + ReLU + conv2 + ReLU -----------------
    c2p = pl.pallas_call(
        _resize_conv12_kernel,
        out_shape=jax.ShapeDtypeStruct((N, Ho2p, C2, Wo2p), jnp.float32),
        grid=(N,),
        in_specs=[
            pl.BlockSpec((1, C_IN, H, W), lambda n: (n, 0, 0, 0)),
            pl.BlockSpec((Hout, H), lambda n: (0, 0)),
            pl.BlockSpec((W, Wout), lambda n: (0, 0)),
            pl.BlockSpec((C1, K1_FLAT), lambda n: (0, 0)),
            pl.BlockSpec((C1, 1), lambda n: (0, 0)),
            pl.BlockSpec((C2, C1), lambda n: (0, 0)),
            pl.BlockSpec((C2, 1), lambda n: (0, 0)),
        ],
        out_specs=pl.BlockSpec((1, Ho2p, C2, Wo2p), lambda n: (n, 0, 0, 0)),
        scratch_shapes=[
            pltpu.VMEM((C_IN, Hp, Wp), jnp.float32),
            pltpu.VMEM((K1_FLAT, Wout), jnp.float32),
        ],
        compiler_params=pltpu.CompilerParams(dimension_semantics=("parallel",)),
    )(x_nchw, Rh, RwT, w1f, b1, w2f, b2)

    # ---- conv3, direct NCHW output ----------------------------------------
    n_rblk = (Hout + 7) // 8
    Hout_pad = n_rblk * 8
    out = pl.pallas_call(
        functools.partial(_conv3_kernel, Hout=Hout),
        out_shape=jax.ShapeDtypeStruct((N, C_IN, Hout_pad, Wout), jnp.float32),
        grid=(N, n_rblk),
        in_specs=[
            pl.BlockSpec((1, Ho2p, C2, Wo2p), lambda n, r: (n, 0, 0, 0)),
            pl.BlockSpec((C_IN, K3_FLAT), lambda n, r: (0, 0)),
            pl.BlockSpec((C_IN, 1), lambda n, r: (0, 0)),
        ],
        out_specs=pl.BlockSpec((1, C_IN, 8, Wout), lambda n, r: (n, 0, r, 0)),
        scratch_shapes=[pltpu.VMEM((K3_FLAT, Wout), jnp.float32)],
        compiler_params=pltpu.CompilerParams(
            dimension_semantics=("parallel", "parallel")),
    )(c2p, w3f, b3)

    if Hout_pad != Hout:
        out = out[:, :, :Hout, :]
    return out


# ---------------------------------------------------------------------------
# Deterministic synthetic parameters (torch OIHW layouts from nn.Module.__init__)
# ---------------------------------------------------------------------------
def init_params(key):
    ks = jax.random.split(key, 6)
    return {
        "w1": jax.random.normal(ks[0], (C1, C_IN, K1, K1), jnp.float32) * 0.05,
        "b1": jax.random.normal(ks[1], (C1,), jnp.float32) * 0.05,
        "w2": jax.random.normal(ks[2], (C2, C1, 1, 1), jnp.float32) * 0.05,
        "b2": jax.random.normal(ks[3], (C2,), jnp.float32) * 0.05,
        "w3": jax.random.normal(ks[4], (C_IN, C2, K3, K3), jnp.float32) * 0.05,
        "b3": jax.random.normal(ks[5], (C_IN,), jnp.float32) * 0.05,
    }


if __name__ == "__main__":
    root = jax.random.PRNGKey(0)
    kp, kx = jax.random.split(root)
    params = init_params(kp)

    # Small example input consistent with the module: NCHW, 3 channels.
    x = jax.random.normal(kx, (2, 3, 16, 16), jnp.float32)
    upscale_factor = np.array([1.0, 1.0, 2.0, 2.0], dtype=np.float32)

    out = strange_super_resolution_net(x, upscale_factor, params)
    out = jax.block_until_ready(out)
    assert out.shape == (2, 3, 32, 32), out.shape
    assert out.dtype == jnp.float32
    print("KERNEL_OK")
</pallas_src>

<mosaic_0001>
module attributes {stable_mosaic.version = 11 : i64} {
  func.func @_resize_conv12_kernel(%arg0: i32, %arg1: memref<1x3x16x16xf32, #tpu.memory_space<vmem>>, %arg2: memref<32x16xf32, #tpu.memory_space<vmem>>, %arg3: memref<16x32xf32, #tpu.memory_space<vmem>>, %arg4: memref<64x256xf32, #tpu.memory_space<vmem>>, %arg5: memref<64x1xf32, #tpu.memory_space<vmem>>, %arg6: memref<32x64xf32, #tpu.memory_space<vmem>>, %arg7: memref<32x1xf32, #tpu.memory_space<vmem>>, %arg8: memref<1x36x32x36xf32, #tpu.memory_space<vmem>>, %arg9: memref<3x40x40xf32, #tpu.memory_space<vmem>>, %arg10: memref<256x32xf32, #tpu.memory_space<vmem>>) attributes {dimension_semantics = [#tpu.dimension_semantics<parallel>], iteration_bounds = array<i64: 2>, scalar_prefetch = 0 : i64, scratch_operands = 2 : i64, tpu.core_type = #tpu.core_type<tc>, window_params = [{transform_indices = @transform_0, window_bounds = array<i64: 1, 3, 16, 16>}, {pipeline_mode = #tpu.pipeline_mode<synchronous>, transform_indices = @transform_1, window_bounds = array<i64: 32, 16>}, {pipeline_mode = #tpu.pipeline_mode<synchronous>, transform_indices = @transform_2, window_bounds = array<i64: 16, 32>}, {pipeline_mode = #tpu.pipeline_mode<synchronous>, transform_indices = @transform_3, window_bounds = array<i64: 64, 256>}, {pipeline_mode = #tpu.pipeline_mode<synchronous>, transform_indices = @transform_4, window_bounds = array<i64: 64, 1>}, {pipeline_mode = #tpu.pipeline_mode<synchronous>, transform_indices = @transform_5, window_bounds = array<i64: 32, 64>}, {pipeline_mode = #tpu.pipeline_mode<synchronous>, transform_indices = @transform_6, window_bounds = array<i64: 32, 1>}, {transform_indices = @transform_7, window_bounds = array<i64: 1, 36, 32, 36>}]} {
    %cst = arith.constant 0.000000e+00 : f32
    %0 = vector.broadcast %cst : f32 to vector<3x40x40xf32>
    %c0 = arith.constant 0 : index
    %c0_0 = arith.constant 0 : index
    %c0_1 = arith.constant 0 : index
    %1 = vector.load %arg9[%c0, %c0_0, %c0_1] : memref<3x40x40xf32, #tpu.memory_space<vmem>>, vector<3x40x40xf32>
    tpu.vector_store %arg9[%c0, %c0_0, %c0_1], %0 {strides = array<i32>} : memref<3x40x40xf32, #tpu.memory_space<vmem>>, vector<3x40x40xf32>,
    %cst_2 = arith.constant 0.000000e+00 : f32
    %2 = vector.broadcast %cst_2 : f32 to vector<256x32xf32>
    %c0_3 = arith.constant 0 : index
    %c0_4 = arith.constant 0 : index
    %3 = vector.load %arg10[%c0_3, %c0_4] : memref<256x32xf32, #tpu.memory_space<vmem>>, vector<256x32xf32>
    tpu.vector_store %arg10[%c0_3, %c0_4], %2 {strides = array<i32>} : memref<256x32xf32, #tpu.memory_space<vmem>>, vector<256x32xf32>,
    %cst_5 = arith.constant 0.000000e+00 : f32
    %4 = vector.broadcast %cst_5 : f32 to vector<1x36x32x36xf32>
    %c0_6 = arith.constant 0 : index
    %c0_7 = arith.constant 0 : index
    %c0_8 = arith.constant 0 : index
    %c0_9 = arith.constant 0 : index
    %5 = vector.load %arg8[%c0_6, %c0_7, %c0_8, %c0_9] : memref<1x36x32x36xf32, #tpu.memory_space<vmem>>, vector<1x36x32x36xf32>
    tpu.vector_store %arg8[%c0_6, %c0_7, %c0_8, %c0_9], %4 {strides = array<i32>} : memref<1x36x32x36xf32, #tpu.memory_space<vmem>>, vector<1x36x32x36xf32>,
    %c0_10 = arith.constant 0 : index
    %c0_11 = arith.constant 0 : index
    %c0_12 = arith.constant 0 : index
    %c0_13 = arith.constant 0 : index
    %6 = vector.load %arg1[%c0_10, %c0_11, %c0_12, %c0_13] : memref<1x3x16x16xf32, #tpu.memory_space<vmem>>, vector<1x1x16x16xf32>
    %7 = vector.shape_cast %6 : vector<1x1x16x16xf32> to vector<16x16xf32>
    %c0_14 = arith.constant 0 : index
    %c0_15 = arith.constant 0 : index
    %8 = vector.load %arg3[%c0_14, %c0_15] : memref<16x32xf32, #tpu.memory_space<vmem>>, vector<16x32xf32>
    %cst_16 = arith.constant dense<0.000000e+00> : vector<16x32xf32>
    %9 = tpu.matmul %7, %8, %cst_16 {dimension_numbers = #tpu.dot_dimension_numbers<[1], [0], [0], [1], [0, 0, 1, 1], [], []>} : vector<16x16xf32>, vector<16x32xf32>, vector<16x32xf32> -> vector<16x32xf32>
    %c0_17 = arith.constant 0 : index
    %c0_18 = arith.constant 0 : index
    %10 = vector.load %arg2[%c0_17, %c0_18] : memref<32x16xf32, #tpu.memory_space<vmem>>, vector<32x16xf32>
    %cst_19 = arith.constant dense<0.000000e+00> : vector<32x32xf32>
    %11 = tpu.matmul %10, %9, %cst_19 {dimension_numbers = #tpu.dot_dimension_numbers<[1], [0], [0], [1], [0, 0, 1, 1], [], []>} : vector<32x16xf32>, vector<16x32xf32>, vector<32x32xf32> -> vector<32x32xf32>
    %c0_20 = arith.constant 0 : index
    %c4 = arith.constant 4 : index
    %c4_21 = arith.constant 4 : index
    %12 = vector.load %arg9[%c0_20, %c4, %c4_21] : memref<3x40x40xf32, #tpu.memory_space<vmem>>, vector<1x32x32xf32>
    %13 = vector.shape_cast %12 : vector<1x32x32xf32> to vector<32x32xf32>
    %14 = vector.shape_cast %11 : vector<32x32xf32> to vector<1x32x32xf32>
    tpu.vector_store %arg9[%c0_20, %c4, %c4_21], %14 {strides = array<i32>} : memref<3x40x40xf32, #tpu.memory_space<vmem>>, vector<1x32x32xf32>,
    %c0_22 = arith.constant 0 : index
    %c1 = arith.constant 1 : index
    %c0_23 = arith.constant 0 : index
    %c0_24 = arith.constant 0 : index
    %15 = vector.load %arg1[%c0_22, %c1, %c0_23, %c0_24] : memref<1x3x16x16xf32, #tpu.memory_space<vmem>>, vector<1x1x16x16xf32>
    %16 = vector.shape_cast %15 : vector<1x1x16x16xf32> to vector<16x16xf32>
    %c0_25 = arith.constant 0 : index
    %c0_26 = arith.constant 0 : index
    %17 = vector.load %arg3[%c0_25, %c0_26] : memref<16x32xf32, #tpu.memory_space<vmem>>, vector<16x32xf32>
    %cst_27 = arith.constant dense<0.000000e+00> : vector<16x32xf32>
    %18 = tpu.matmul %16, %17, %cst_27 {dimension_numbers = #tpu.dot_dimension_numbers<[1], [0], [0], [1], [0, 0, 1, 1], [], []>} : vector<16x16xf32>, vector<16x32xf32>, vector<16x32xf32> -> vector<16x32xf32>
    %c0_28 = arith.constant 0 : index
    %c0_29 = arith.constant 0 : index
    %19 = vector.load %arg2[%c0_28, %c0_29] : memref<32x16xf32, #tpu.memory_space<vmem>>, vector<32x16xf32>
    %cst_30 = arith.constant dense<0.000000e+00> : vector<32x32xf32>
    %20 = tpu.matmul %19, %18, %cst_30 {dimension_numbers = #tpu.dot_dimension_numbers<[1], [0], [0], [1], [0, 0, 1, 1], [], []>} : vector<32x16xf32>, vector<16x32xf32>, vector<32x32xf32> -> vector<32x32xf32>
    %c1_31 = arith.constant 1 : index
    %c4_32 = arith.constant 4 : index
    %c4_33 = arith.constant 4 : index
    %21 = vector.load %arg9[%c1_31, %c4_32, %c4_33] : memref<3x40x40xf32, #tpu.memory_space<vmem>>, vector<1x32x32xf32>
    %22 = vector.shape_cast %21 : vector<1x32x32xf32> to vector<32x32xf32>
    %23 = vector.shape_cast %20 : vector<32x32xf32> to vector<1x32x32xf32>
    tpu.vector_store %arg9[%c1_31, %c4_32, %c4_33], %23 {strides = array<i32>} : memref<3x40x40xf32, #tpu.memory_space<vmem>>, vector<1x32x32xf32>,
    %c0_34 = arith.constant 0 : index
    %c2 = arith.constant 2 : index
    %c0_35 = arith.constant 0 : index
    %c0_36 = arith.constant 0 : index
    %24 = vector.load %arg1[%c0_34, %c2, %c0_35, %c0_36] : memref<1x3x16x16xf32, #tpu.memory_space<vmem>>, vector<1x1x16x16xf32>
    %25 = vector.shape_cast %24 : vector<1x1x16x16xf32> to vector<16x16xf32>
    %c0_37 = arith.constant 0 : index
    %c0_38 = arith.constant 0 : index
    %26 = vector.load %arg3[%c0_37, %c0_38] : memref<16x32xf32, #tpu.memory_space<vmem>>, vector<16x32xf32>
    %cst_39 = arith.constant dense<0.000000e+00> : vector<16x32xf32>
    %27 = tpu.matmul %25, %26, %cst_39 {dimension_numbers = #tpu.dot_dimension_numbers<[1], [0], [0], [1], [0, 0, 1, 1], [], []>} : vector<16x16xf32>, vector<16x32xf32>, vector<16x32xf32> -> vector<16x32xf32>
    %c0_40 = arith.constant 0 : index
    %c0_41 = arith.constant 0 : index
    %28 = vector.load %arg2[%c0_40, %c0_41] : memref<32x16xf32, #tpu.memory_space<vmem>>, vector<32x16xf32>
    %cst_42 = arith.constant dense<0.000000e+00> : vector<32x32xf32>
    %29 = tpu.matmul %28, %27, %cst_42 {dimension_numbers = #tpu.dot_dimension_numbers<[1], [0], [0], [1], [0, 0, 1, 1], [], []>} : vector<32x16xf32>, vector<16x32xf32>, vector<32x32xf32> -> vector<32x32xf32>
    %c2_43 = arith.constant 2 : index
    %c4_44 = arith.constant 4 : index
    %c4_45 = arith.constant 4 : index
    %30 = vector.load %arg9[%c2_43, %c4_44, %c4_45] : memref<3x40x40xf32, #tpu.memory_space<vmem>>, vector<1x32x32xf32>
    %31 = vector.shape_cast %30 : vector<1x32x32xf32> to vector<32x32xf32>
    %32 = vector.shape_cast %29 : vector<32x32xf32> to vector<1x32x32xf32>
    tpu.vector_store %arg9[%c2_43, %c4_44, %c4_45], %32 {strides = array<i32>} : memref<3x40x40xf32, #tpu.memory_space<vmem>>, vector<1x32x32xf32>,
    %c0_i32 = arith.constant 0 : i32
    %c32_i32 = arith.constant 32 : i32
    %33 = arith.addi %c0_i32, %c32_i32 : i32
    %c1_i32 = arith.constant 1 : i32
    scf.for %arg11 = %c0_i32 to %33 step %c1_i32  : i32 {
      %c0_47 = arith.constant 0 : index
      %34 = arith.index_cast %arg11 : i32 to index
      %c0_48 = arith.constant 0 : index
      %35 = vector.load %arg9[%c0_47, %34, %c0_48] : memref<3x40x40xf32, #tpu.memory_space<vmem>>, vector<1x9x32xf32>
      %36 = vector.shape_cast %35 : vector<1x9x32xf32> to vector<9x32xf32>
      %c0_49 = arith.constant 0 : index
      %c0_50 = arith.constant 0 : index
      %37 = vector.load %arg10[%c0_49, %c0_50] : memref<256x32xf32, #tpu.memory_space<vmem>>, vector<9x32xf32>
      tpu.vector_store %arg10[%c0_49, %c0_50], %36 {strides = array<i32>} : memref<256x32xf32, #tpu.memory_space<vmem>>, vector<9x32xf32>,
      %c0_51 = arith.constant 0 : index
      %38 = arith.index_cast %arg11 : i32 to index
      %c1_52 = arith.constant 1 : index
      %39 = vector.load %arg9[%c0_51, %38, %c1_52] : memref<3x40x40xf32, #tpu.memory_space<vmem>>, vector<1x9x32xf32>
      %40 = vector.shape_cast %39 : vector<1x9x32xf32> to vector<9x32xf32>
      %c9 = arith.constant 9 : index
      %c0_53 = arith.constant 0 : index
      %41 = vector.load %arg10[%c9, %c0_53] : memref<256x32xf32, #tpu.memory_space<vmem>>, vector<9x32xf32>
      tpu.vector_store %arg10[%c9, %c0_53], %40 {strides = array<i32>} : memref<256x32xf32, #tpu.memory_space<vmem>>, vector<9x32xf32>,
      %c0_54 = arith.constant 0 : index
      %42 = arith.index_cast %arg11 : i32 to index
      %c2_55 = arith.constant 2 : index
      %43 = vector.load %arg9[%c0_54, %42, %c2_55] : memref<3x40x40xf32, #tpu.memory_space<vmem>>, vector<1x9x32xf32>
      %44 = vector.shape_cast %43 : vector<1x9x32xf32> to vector<9x32xf32>
      %c18 = arith.constant 18 : index
      %c0_56 = arith.constant 0 : index
      %45 = vector.load %arg10[%c18, %c0_56] : memref<256x32xf32, #tpu.memory_space<vmem>>, vector<9x32xf32>
      tpu.vector_store %arg10[%c18, %c0_56], %44 {strides = array<i32>} : memref<256x32xf32, #tpu.memory_space<vmem>>, vector<9x32xf32>,
      %c0_57 = arith.constant 0 : index
      %46 = arith.index_cast %arg11 : i32 to index
      %c3 = arith.constant 3 : index
      %47 = vector.load %arg9[%c0_57, %46, %c3] : memref<3x40x40xf32, #tpu.memory_space<vmem>>, vector<1x9x32xf32>
      %48 = vector.shape_cast %47 : vector<1x9x32xf32> to vector<9x32xf32>
      %c27 = arith.constant 27 : index
      %c0_58 = arith.constant 0 : index
      %49 = vector.load %arg10[%c27, %c0_58] : memref<256x32xf32, #tpu.memory_space<vmem>>, vector<9x32xf32>
      tpu.vector_store %arg10[%c27, %c0_58], %48 {strides = array<i32>} : memref<256x32xf32, #tpu.memory_space<vmem>>, vector<9x32xf32>,
      %c0_59 = arith.constant 0 : index
      %50 = arith.index_cast %arg11 : i32 to index
      %c4_60 = arith.constant 4 : index
      %51 = vector.load %arg9[%c0_59, %50, %c4_60] : memref<3x40x40xf32, #tpu.memory_space<vmem>>, vector<1x9x32xf32>
      %52 = vector.shape_cast %51 : vector<1x9x32xf32> to vector<9x32xf32>
      %c36 = arith.constant 36 : index
      %c0_61 = arith.constant 0 : index
      %53 = vector.load %arg10[%c36, %c0_61] : memref<256x32xf32, #tpu.memory_space<vmem>>, vector<9x32xf32>
      tpu.vector_store %arg10[%c36, %c0_61], %52 {strides = array<i32>} : memref<256x32xf32, #tpu.memory_space<vmem>>, vector<9x32xf32>,
      %c0_62 = arith.constant 0 : index
      %54 = arith.index_cast %arg11 : i32 to index
      %c5 = arith.constant 5 : index
      %55 = vector.load %arg9[%c0_62, %54, %c5] : memref<3x40x40xf32, #tpu.memory_space<vmem>>, vector<1x9x32xf32>
      %56 = vector.shape_cast %55 : vector<1x9x32xf32> to vector<9x32xf32>
      %c45 = arith.constant 45 : index
      %c0_63 = arith.constant 0 : index
      %57 = vector.load %arg10[%c45, %c0_63] : memref<256x32xf32, #tpu.memory_space<vmem>>, vector<9x32xf32>
      tpu.vector_store %arg10[%c45, %c0_63], %56 {strides = array<i32>} : memref<256x32xf32, #tpu.memory_space<vmem>>, vector<9x32xf32>,
      %c0_64 = arith.constant 0 : index
      %58 = arith.index_cast %arg11 : i32 to index
      %c6 = arith.constant 6 : index
      %59 = vector.load %arg9[%c0_64, %58, %c6] : memref<3x40x40xf32, #tpu.memory_space<vmem>>, vector<1x9x32xf32>
      %60 = vector.shape_cast %59 : vector<1x9x32xf32> to vector<9x32xf32>
      %c54 = arith.constant 54 : index
      %c0_65 = arith.constant 0 : index
      %61 = vector.load %arg10[%c54, %c0_65] : memref<256x32xf32, #tpu.memory_space<vmem>>, vector<9x32xf32>
      tpu.vector_store %arg10[%c54, %c0_65], %60 {strides = array<i32>} : memref<256x32xf32, #tpu.memory_space<vmem>>, vector<9x32xf32>,
      %c0_66 = arith.constant 0 : index
      %62 = arith.index_cast %arg11 : i32 to index
      %c7 = arith.constant 7 : index
      %63 = vector.load %arg9[%c0_66, %62, %c7] : memref<3x40x40xf32, #tpu.memory_space<vmem>>, vector<1x9x32xf32>
      %64 = vector.shape_cast %63 : vector<1x9x32xf32> to vector<9x32xf32>
      %c63 = arith.constant 63 : index
      %c0_67 = arith.constant 0 : index
      %65 = vector.load %arg10[%c63, %c0_67] : memref<256x32xf32, #tpu.memory_space<vmem>>, vector<9x32xf32>
      tpu.vector_store %arg10[%c63, %c0_67], %64 {strides = array<i32>} : memref<256x32xf32, #tpu.memory_space<vmem>>, vector<9x32xf32>,
      %c0_68 = arith.constant 0 : index
      %66 = arith.index_cast %arg11 : i32 to index
      %c8 = arith.constant 8 : index
      %67 = vector.load %arg9[%c0_68, %66, %c8] : memref<3x40x40xf32, #tpu.memory_space<vmem>>, vector<1x9x32xf32>
      %68 = vector.shape_cast %67 : vector<1x9x32xf32> to vector<9x32xf32>
      %c72 = arith.constant 72 : index
      %c0_69 = arith.constant 0 : index
      %69 = vector.load %arg10[%c72, %c0_69] : memref<256x32xf32, #tpu.memory_space<vmem>>, vector<9x32xf32>
      tpu.vector_store %arg10[%c72, %c0_69], %68 {strides = array<i32>} : memref<256x32xf32, #tpu.memory_space<vmem>>, vector<9x32xf32>,
      %c1_70 = arith.constant 1 : index
      %70 = arith.index_cast %arg11 : i32 to index
      %c0_71 = arith.constant 0 : index
      %71 = vector.load %arg9[%c1_70, %70, %c0_71] : memref<3x40x40xf32, #tpu.memory_space<vmem>>, vector<1x9x32xf32>
      %72 = vector.shape_cast %71 : vector<1x9x32xf32> to vector<9x32xf32>
      %c81 = arith.constant 81 : index
      %c0_72 = arith.constant 0 : index
      %73 = vector.load %arg10[%c81, %c0_72] : memref<256x32xf32, #tpu.memory_space<vmem>>, vector<9x32xf32>
      tpu.vector_store %arg10[%c81, %c0_72], %72 {strides = array<i32>} : memref<256x32xf32, #tpu.memory_space<vmem>>, vector<9x32xf32>,
      %c1_73 = arith.constant 1 : index
      %74 = arith.index_cast %arg11 : i32 to index
      %c1_74 = arith.constant 1 : index
      %75 = vector.load %arg9[%c1_73, %74, %c1_74] : memref<3x40x40xf32, #tpu.memory_space<vmem>>, vector<1x9x32xf32>
      %76 = vector.shape_cast %75 : vector<1x9x32xf32> to vector<9x32xf32>
      %c90 = arith.constant 90 : index
      %c0_75 = arith.constant 0 : index
      %77 = vector.load %arg10[%c90, %c0_75] : memref<256x32xf32, #tpu.memory_space<vmem>>, vector<9x32xf32>
      tpu.vector_store %arg10[%c90, %c0_75], %76 {strides = array<i32>} : memref<256x32xf32, #tpu.memory_space<vmem>>, vector<9x32xf32>,
      %c1_76 = arith.constant 1 : index
      %78 = arith.index_cast %arg11 : i32 to index
      %c2_77 = arith.constant 2 : index
      %79 = vector.load %arg9[%c1_76, %78, %c2_77] : memref<3x40x40xf32, #tpu.memory_space<vmem>>, vector<1x9x32xf32>
      %80 = vector.shape_cast %79 : vector<1x9x32xf32> to vector<9x32xf32>
      %c99 = arith.constant 99 : index
      %c0_78 = arith.constant 0 : index
      %81 = vector.load %arg10[%c99, %c0_78] : memref<256x32xf32, #tpu.memory_space<vmem>>, vector<9x32xf32>
      tpu.vector_store %arg10[%c99, %c0_78], %80 {strides = array<i32>} : memref<256x32xf32, #tpu.memory_space<vmem>>, vector<9x32xf32>,
      %c1_79 = arith.constant 1 : index
      %82 = arith.index_cast %arg11 : i32 to index
      %c3_80 = arith.constant 3 : index
      %83 = vector.load %arg9[%c1_79, %82, %c3_80] : memref<3x40x40xf32, #tpu.memory_space<vmem>>, vector<1x9x32xf32>
      %84 = vector.shape_cast %83 : vector<1x9x32xf32> to vector<9x32xf32>
      %c108 = arith.constant 108 : index
      %c0_81 = arith.constant 0 : index
      %85 = vector.load %arg10[%c108, %c0_81] : memref<256x32xf32, #tpu.memory_space<vmem>>, vector<9x32xf32>
      tpu.vector_store %arg10[%c108, %c0_81], %84 {strides = array<i32>} : memref<256x32xf32, #tpu.memory_space<vmem>>, vector<9x32xf32>,
      %c1_82 = arith.constant 1 : index
      %86 = arith.index_cast %arg11 : i32 to index
      %c4_83 = arith.constant 4 : index
      %87 = vector.load %arg9[%c1_82, %86, %c4_83] : memref<3x40x40xf32, #tpu.memory_space<vmem>>, vector<1x9x32xf32>
      %88 = vector.shape_cast %87 : vector<1x9x32xf32> to vector<9x32xf32>
      %c117 = arith.constant 117 : index
      %c0_84 = arith.constant 0 : index
      %89 = vector.load %arg10[%c117, %c0_84] : memref<256x32xf32, #tpu.memory_space<vmem>>, vector<9x32xf32>
      tpu.vector_store %arg10[%c117, %c0_84], %88 {strides = array<i32>} : memref<256x32xf32, #tpu.memory_space<vmem>>, vector<9x32xf32>,
      %c1_85 = arith.constant 1 : index
      %90 = arith.index_cast %arg11 : i32 to index
      %c5_86 = arith.constant 5 : index
      %91 = vector.load %arg9[%c1_85, %90, %c5_86] : memref<3x40x40xf32, #tpu.memory_space<vmem>>, vector<1x9x32xf32>
      %92 = vector.shape_cast %91 : vector<1x9x32xf32> to vector<9x32xf32>
      %c126 = arith.constant 126 : index
      %c0_87 = arith.constant 0 : index
      %93 = vector.load %arg10[%c126, %c0_87] : memref<256x32xf32, #tpu.memory_space<vmem>>, vector<9x32xf32>
      tpu.vector_store %arg10[%c126, %c0_87], %92 {strides = array<i32>} : memref<256x32xf32, #tpu.memory_space<vmem>>, vector<9x32xf32>,
      %c1_88 = arith.constant 1 : index
      %94 = arith.index_cast %arg11 : i32 to index
      %c6_89 = arith.constant 6 : index
      %95 = vector.load %arg9[%c1_88, %94, %c6_89] : memref<3x40x40xf32, #tpu.memory_space<vmem>>, vector<1x9x32xf32>
      %96 = vector.shape_cast %95 : vector<1x9x32xf32> to vector<9x32xf32>
      %c135 = arith.constant 135 : index
      %c0_90 = arith.constant 0 : index
      %97 = vector.load %arg10[%c135, %c0_90] : memref<256x32xf32, #tpu.memory_space<vmem>>, vector<9x32xf32>
      tpu.vector_store %arg10[%c135, %c0_90], %96 {strides = array<i32>} : memref<256x32xf32, #tpu.memory_space<vmem>>, vector<9x32xf32>,
      %c1_91 = arith.constant 1 : index
      %98 = arith.index_cast %arg11 : i32 to index
      %c7_92 = arith.constant 7 : index
      %99 = vector.load %arg9[%c1_91, %98, %c7_92] : memref<3x40x40xf32, #tpu.memory_space<vmem>>, vector<1x9x32xf32>
      %100 = vector.shape_cast %99 : vector<1x9x32xf32> to vector<9x32xf32>
      %c144 = arith.constant 144 : index
      %c0_93 = arith.constant 0 : index
      %101 = vector.load %arg10[%c144, %c0_93] : memref<256x32xf32, #tpu.memory_space<vmem>>, vector<9x32xf32>
      tpu.vector_store %arg10[%c144, %c0_93], %100 {strides = array<i32>} : memref<256x32xf32, #tpu.memory_space<vmem>>, vector<9x32xf32>,
      %c1_94 = arith.constant 1 : index
      %102 = arith.index_cast %arg11 : i32 to index
      %c8_95 = arith.constant 8 : index
      %103 = vector.load %arg9[%c1_94, %102, %c8_95] : memref<3x40x40xf32, #tpu.memory_space<vmem>>, vector<1x9x32xf32>
      %104 = vector.shape_cast %103 : vector<1x9x32xf32> to vector<9x32xf32>
      %c153 = arith.constant 153 : index
      %c0_96 = arith.constant 0 : index
      %105 = vector.load %arg10[%c153, %c0_96] : memref<256x32xf32, #tpu.memory_space<vmem>>, vector<9x32xf32>
      tpu.vector_store %arg10[%c153, %c0_96], %104 {strides = array<i32>} : memref<256x32xf32, #tpu.memory_space<vmem>>, vector<9x32xf32>,
      %c2_97 = arith.constant 2 : index
      %106 = arith.index_cast %arg11 : i32 to index
      %c0_98 = arith.constant 0 : index
      %107 = vector.load %arg9[%c2_97, %106, %c0_98] : memref<3x40x40xf32, #tpu.memory_space<vmem>>, vector<1x9x32xf32>
      %108 = vector.shape_cast %107 : vector<1x9x32xf32> to vector<9x32xf32>
      %c162 = arith.constant 162 : index
      %c0_99 = arith.constant 0 : index
      %109 = vector.load %arg10[%c162, %c0_99] : memref<256x32xf32, #tpu.memory_space<vmem>>, vector<9x32xf32>
      tpu.vector_store %arg10[%c162, %c0_99], %108 {strides = array<i32>} : memref<256x32xf32, #tpu.memory_space<vmem>>, vector<9x32xf32>,
      %c2_100 = arith.constant 2 : index
      %110 = arith.index_cast %arg11 : i32 to index
      %c1_101 = arith.constant 1 : index
      %111 = vector.load %arg9[%c2_100, %110, %c1_101] : memref<3x40x40xf32, #tpu.memory_space<vmem>>, vector<1x9x32xf32>
      %112 = vector.shape_cast %111 : vector<1x9x32xf32> to vector<9x32xf32>
      %c171 = arith.constant 171 : index
      %c0_102 = arith.constant 0 : index
      %113 = vector.load %arg10[%c171, %c0_102] : memref<256x32xf32, #tpu.memory_space<vmem>>, vector<9x32xf32>
      tpu.vector_store %arg10[%c171, %c0_102], %112 {strides = array<i32>} : memref<256x32xf32, #tpu.memory_space<vmem>>, vector<9x32xf32>,
      %c2_103 = arith.constant 2 : index
      %114 = arith.index_cast %arg11 : i32 to index
      %c2_104 = arith.constant 2 : index
      %115 = vector.load %arg9[%c2_103, %114, %c2_104] : memref<3x40x40xf32, #tpu.memory_space<vmem>>, vector<1x9x32xf32>
      %116 = vector.shape_cast %115 : vector<1x9x32xf32> to vector<9x32xf32>
      %c180 = arith.constant 180 : index
      %c0_105 = arith.constant 0 : index
      %117 = vector.load %arg10[%c180, %c0_105] : memref<256x32xf32, #tpu.memory_space<vmem>>, vector<9x32xf32>
      tpu.vector_store %arg10[%c180, %c0_105], %116 {strides = array<i32>} : memref<256x32xf32, #tpu.memory_space<vmem>>, vector<9x32xf32>,
      %c2_106 = arith.constant 2 : index
      %118 = arith.index_cast %arg11 : i32 to index
      %c3_107 = arith.constant 3 : index
      %119 = vector.load %arg9[%c2_106, %118, %c3_107] : memref<3x40x40xf32, #tpu.memory_space<vmem>>, vector<1x9x32xf32>
      %120 = vector.shape_cast %119 : vector<1x9x32xf32> to vector<9x32xf32>
      %c189 = arith.constant 189 : index
      %c0_108 = arith.constant 0 : index
      %121 = vector.load %arg10[%c189, %c0_108] : memref<256x32xf32, #tpu.memory_space<vmem>>, vector<9x32xf32>
      tpu.vector_store %arg10[%c189, %c0_108], %120 {strides = array<i32>} : memref<256x32xf32, #tpu.memory_space<vmem>>, vector<9x32xf32>,
      %c2_109 = arith.constant 2 : index
      %122 = arith.index_cast %arg11 : i32 to index
      %c4_110 = arith.constant 4 : index
      %123 = vector.load %arg9[%c2_109, %122, %c4_110] : memref<3x40x40xf32, #tpu.memory_space<vmem>>, vector<1x9x32xf32>
      %124 = vector.shape_cast %123 : vector<1x9x32xf32> to vector<9x32xf32>
      %c198 = arith.constant 198 : index
      %c0_111 = arith.constant 0 : index
      %125 = vector.load %arg10[%c198, %c0_111] : memref<256x32xf32, #tpu.memory_space<vmem>>, vector<9x32xf32>
      tpu.vector_store %arg10[%c198, %c0_111], %124 {strides = array<i32>} : memref<256x32xf32, #tpu.memory_space<vmem>>, vector<9x32xf32>,
      %c2_112 = arith.constant 2 : index
      %126 = arith.index_cast %arg11 : i32 to index
      %c5_113 = arith.constant 5 : index
      %127 = vector.load %arg9[%c2_112, %126, %c5_113] : memref<3x40x40xf32, #tpu.memory_space<vmem>>, vector<1x9x32xf32>
      %128 = vector.shape_cast %127 : vector<1x9x32xf32> to vector<9x32xf32>
      %c207 = arith.constant 207 : index
      %c0_114 = arith.constant 0 : index
      %129 = vector.load %arg10[%c207, %c0_114] : memref<256x32xf32, #tpu.memory_space<vmem>>, vector<9x32xf32>
      tpu.vector_store %arg10[%c207, %c0_114], %128 {strides = array<i32>} : memref<256x32xf32, #tpu.memory_space<vmem>>, vector<9x32xf32>,
      %c2_115 = arith.constant 2 : index
      %130 = arith.index_cast %arg11 : i32 to index
      %c6_116 = arith.constant 6 : index
      %131 = vector.load %arg9[%c2_115, %130, %c6_116] : memref<3x40x40xf32, #tpu.memory_space<vmem>>, vector<1x9x32xf32>
      %132 = vector.shape_cast %131 : vector<1x9x32xf32> to vector<9x32xf32>
      %c216 = arith.constant 216 : index
      %c0_117 = arith.constant 0 : index
      %133 = vector.load %arg10[%c216, %c0_117] : memref<256x32xf32, #tpu.memory_space<vmem>>, vector<9x32xf32>
      tpu.vector_store %arg10[%c216, %c0_117], %132 {strides = array<i32>} : memref<256x32xf32, #tpu.memory_space<vmem>>, vector<9x32xf32>,
      %c2_118 = arith.constant 2 : index
      %134 = arith.index_cast %arg11 : i32 to index
      %c7_119 = arith.constant 7 : index
      %135 = vector.load %arg9[%c2_118, %134, %c7_119] : memref<3x40x40xf32, #tpu.memory_space<vmem>>, vector<1x9x32xf32>
      %136 = vector.shape_cast %135 : vector<1x9x32xf32> to vector<9x32xf32>
      %c225 = arith.constant 225 : index
      %c0_120 = arith.constant 0 : index
      %137 = vector.load %arg10[%c225, %c0_120] : memref<256x32xf32, #tpu.memory_space<vmem>>, vector<9x32xf32>
      tpu.vector_store %arg10[%c225, %c0_120], %136 {strides = array<i32>} : memref<256x32xf32, #tpu.memory_space<vmem>>, vector<9x32xf32>,
      %c2_121 = arith.constant 2 : index
      %138 = arith.index_cast %arg11 : i32 to index
      %c8_122 = arith.constant 8 : index
      %139 = vector.load %arg9[%c2_121, %138, %c8_122] : memref<3x40x40xf32, #tpu.memory_space<vmem>>, vector<1x9x32xf32>
      %140 = vector.shape_cast %139 : vector<1x9x32xf32> to vector<9x32xf32>
      %c234 = arith.constant 234 : index
      %c0_123 = arith.constant 0 : index
      %141 = vector.load %arg10[%c234, %c0_123] : memref<256x32xf32, #tpu.memory_space<vmem>>, vector<9x32xf32>
      tpu.vector_store %arg10[%c234, %c0_123], %140 {strides = array<i32>} : memref<256x32xf32, #tpu.memory_space<vmem>>, vector<9x32xf32>,
      %c0_124 = arith.constant 0 : index
      %c0_125 = arith.constant 0 : index
      %142 = vector.load %arg4[%c0_124, %c0_125] : memref<64x256xf32, #tpu.memory_space<vmem>>, vector<64x256xf32>
      %c0_126 = arith.constant 0 : index
      %c0_127 = arith.constant 0 : index
      %143 = vector.load %arg10[%c0_126, %c0_127] : memref<256x32xf32, #tpu.memory_space<vmem>>, vector<256x32xf32>
      %cst_128 = arith.constant dense<0.000000e+00> : vector<64x32xf32>
      %144 = tpu.matmul %142, %143, %cst_128 {dimension_numbers = #tpu.dot_dimension_numbers<[1], [0], [0], [1], [0, 0, 1, 1], [], []>} : vector<64x256xf32>, vector<256x32xf32>, vector<64x32xf32> -> vector<64x32xf32>
      %c0_129 = arith.constant 0 : index
      %c0_130 = arith.constant 0 : index
      %145 = vector.load %arg5[%c0_129, %c0_130] : memref<64x1xf32, #tpu.memory_space<vmem>>, vector<64x1xf32>
      %146 = vector.broadcast %145 : vector<64x1xf32> to vector<64x32xf32>
      %147 = arith.addf %144, %146 : vector<64x32xf32>
      %cst_131 = arith.constant 0.000000e+00 : f32
      %148 = vector.broadcast %cst_131 : f32 to vector<64x32xf32>
      %149 = arith.maximumf %147, %148 : vector<64x32xf32>
      %c0_132 = arith.constant 0 : index
      %c0_133 = arith.constant 0 : index
      %150 = vector.load %arg6[%c0_132, %c0_133] : memref<32x64xf32, #tpu.memory_space<vmem>>, vector<32x64xf32>
      %cst_134 = arith.constant dense<0.000000e+00> : vector<32x32xf32>
      %151 = tpu.matmul %150, %149, %cst_134 {dimension_numbers = #tpu.dot_dimension_numbers<[1], [0], [0], [1], [0, 0, 1, 1], [], []>} : vector<32x64xf32>, vector<64x32xf32>, vector<32x32xf32> -> vector<32x32xf32>
      %c0_135 = arith.constant 0 : index
      %c0_136 = arith.constant 0 : index
      %152 = vector.load %arg7[%c0_135, %c0_136] : memref<32x1xf32, #tpu.memory_space<vmem>>, vector<32x1xf32>
      %153 = vector.broadcast %152 : vector<32x1xf32> to vector<32x32xf32>
      %154 = arith.addf %151, %153 : vector<32x32xf32>
      %cst_137 = arith.constant 0.000000e+00 : f32
      %155 = vector.broadcast %cst_137 : f32 to vector<32x32xf32>
      %156 = arith.maximumf %154, %155 : vector<32x32xf32>
      %c2_i32 = arith.constant 2 : i32
      %157 = arith.addi %c2_i32, %arg11 : i32
      %c0_138 = arith.constant 0 : index
      %158 = arith.index_cast %157 : i32 to index
      %c0_139 = arith.constant 0 : index
      %c2_140 = arith.constant 2 : index
      %159 = vector.load %arg8[%c0_138, %158, %c0_139, %c2_140] : memref<1x36x32x36xf32, #tpu.memory_space<vmem>>, vector<1x1x32x32xf32>
      %160 = vector.shape_cast %159 : vector<1x1x32x32xf32> to vector<32x32xf32>
      %161 = vector.shape_cast %156 : vector<32x32xf32> to vector<1x1x32x32xf32>
      tpu.vector_store %arg8[%c0_138, %158, %c0_139, %c2_140], %161 {strides = array<i32>} : memref<1x36x32x36xf32, #tpu.memory_space<vmem>>, vector<1x1x32x32xf32>,
    }
    %c32_i32_46 = arith.constant 32 : i32
    return
  }
  func.func @transform_0(%arg0: i32) -> (i32, i32, i32, i32) {
    %c0_i32 = arith.constant 0 : i32
    %c0_i32_0 = arith.constant 0 : i32
    %c0_i32_1 = arith.constant 0 : i32
    %c0_i32_2 = arith.constant 0 : i32
    return %arg0, %c0_i32, %c0_i32_0, %c0_i32_1 : i32, i32, i32, i32
  }
  func.func @transform_1(%arg0: i32) -> (i32, i32) {
    %c0_i32 = arith.constant 0 : i32
    %c0_i32_0 = arith.constant 0 : i32
    %c0_i32_1 = arith.constant 0 : i32
    return %c0_i32, %c0_i32_0 : i32, i32
  }
  func.func @transform_2(%arg0: i32) -> (i32, i32) {
    %c0_i32 = arith.constant 0 : i32
    %c0_i32_0 = arith.constant 0 : i32
    %c0_i32_1 = arith.constant 0 : i32
    return %c0_i32, %c0_i32_0 : i32, i32
  }
  func.func @transform_3(%arg0: i32) -> (i32, i32) {
    %c0_i32 = arith.constant 0 : i32
    %c0_i32_0 = arith.constant 0 : i32
    %c0_i32_1 = arith.constant 0 : i32
    return %c0_i32, %c0_i32_0 : i32, i32
  }
  func.func @transform_4(%arg0: i32) -> (i32, i32) {
    %c0_i32 = arith.constant 0 : i32
    %c0_i32_0 = arith.constant 0 : i32
    %c0_i32_1 = arith.constant 0 : i32
    return %c0_i32, %c0_i32_0 : i32, i32
  }
  func.func @transform_5(%arg0: i32) -> (i32, i32) {
    %c0_i32 = arith.constant 0 : i32
    %c0_i32_0 = arith.constant 0 : i32
    %c0_i32_1 = arith.constant 0 : i32
    return %c0_i32, %c0_i32_0 : i32, i32
  }
  func.func @transform_6(%arg0: i32) -> (i32, i32) {
    %c0_i32 = arith.constant 0 : i32
    %c0_i32_0 = arith.constant 0 : i32
    %c0_i32_1 = arith.constant 0 : i32
    return %c0_i32, %c0_i32_0 : i32, i32
  }
  func.func @transform_7(%arg0: i32) -> (i32, i32, i32, i32) {
    %c0_i32 = arith.constant 0 : i32
    %c0_i32_0 = arith.constant 0 : i32
    %c0_i32_1 = arith.constant 0 : i32
    %c0_i32_2 = arith.constant 0 : i32
    return %arg0, %c0_i32, %c0_i32_0, %c0_i32_1 : i32, i32, i32, i32
  }
}

</mosaic_0001>

<llo_original>
// kernel: tpu_custom_call.1
$region0: #{tpu_custom_call.1}
  #allocation0 [shape = 'u32[]', space=smem, size = 0x4, offset = 0x4, fixed_abs, tag = 'smem constant byte address 0x4 - core index']
  #allocation1 [shape = 'u32[144,128]{1,0:T(1,128)}', space=vmem, size = 0x12000, scoped, tag = 'internal scratch']
  #allocation2 [shape = 'f32[3,40,40]{2,1,0:T(8,128)}', space=vmem, size = 0xf000, scoped, tag = 'scratch operand']
  #allocation3 [shape = 'f32[256,32]{1,0:T(8,128)}', space=vmem, size = 0x20000, scoped, tag = 'scratch operand']
  %s0 = inlined_call_operand.hbm [shape: f32[2,3,16,16], index: 0, kind: input, shape index: {}]
  %s1 = inlined_call_operand.vmem [shape: f32[32,16], index: 1, kind: input, shape index: {}]
  %s2 = inlined_call_operand.hbm [shape: f32[16,32], index: 2, kind: input, shape index: {}]
  %s3 = inlined_call_operand.hbm [shape: f32[64,256], index: 3, kind: input, shape index: {}]
  %s4 = inlined_call_operand.vmem [shape: f32[64,1], index: 4, kind: input, shape index: {}]
  %s5 = inlined_call_operand.hbm [shape: f32[32,64], index: 5, kind: input, shape index: {}]
  %s6 = inlined_call_operand.vmem [shape: f32[32,1], index: 6, kind: input, shape index: {}]
  %s7 = inlined_call_operand.hbm [shape: f32[2,36,32,36], index: 7, kind: output, shape index: {}]
  %s8 = sld [smem:[#allocation0]]
  $region84: #{tpu_custom_call.1} parent=0
    _
  %s10 = ssub.s32 1, %s8
  %s11 = scalar_select 0, %s10, %s8
  $region1: #{tpu_custom_call.1} parent=0
    #allocation4 [shape = 'u8[49152]{0}', space=vmem, size = 0xc000, scoped, tag = 'input window, operand 0']
    #allocation5 [shape = 's32[2]{0}', space=sflag, size = 0x8, scoped, tag = 'scoped memory for tpu_custom_call.1']
    #allocation6 [shape = 's32[2]{0}', space=sflag, size = 0x8, scoped, tag = 'scoped memory for tpu_custom_call.1']
    #allocation7 [shape = 'u8[8192]{0}', space=vmem, size = 0x2000, scoped, tag = 'input window, operand 2, single buffered']
    #allocation8 [shape = 's32[1]{0}', space=sflag, size = 0x4, scoped, tag = 'scoped memory for tpu_custom_call.1']
    #allocation9 [shape = 'u8[65536]{0}', space=vmem, size = 0x10000, scoped, tag = 'input window, operand 3, single buffered']
    #allocation10 [shape = 'u8[16384]{0}', space=vmem, size = 0x4000, scoped, tag = 'input window, operand 5, single buffered']
    #allocation11 [shape = 's32[1]{0}', space=sflag, size = 0x4, scoped, tag = 'scoped memory for tpu_custom_call.1']
    #allocation12 [shape = 'u8[1179648]{0}', space=vmem, size = 0x120000, scoped, tag = 'output window, operand 0']
    %12 = vsyncpa [#allocation5], 0
    %s13 = scalar_lea.sflag [#allocation5], 1
    %14 = vsyncpa %s13, 0
    %15 = vsyncpa [#allocation8], 0
    %16 = vsyncpa [#allocation11], 0
    %17 = vsyncpa [#allocation6], 0
    %s18 = scalar_lea.sflag [#allocation6], 1
    %19 = vsyncpa %s18, 0
    loop: start=0, step=1, limit=4
    $region2: #{tpu_custom_call.1} parent=1 // loop_pre_header
      _
    $region3: #{tpu_custom_call.1} parent=1 // loop_header
      %s21 = sphi 0, %s25
      %p22 = scmp.ge.s32.totalorder %s21, 4
      %s31 = sphi 0, %s33
      %s34 = sphi 0, %s31
      %s35 = sphi 0, %s34
      %s51 = sphi 0, %s35
      %s55 = sphi 0, %s55
      %s57 = sphi 0, %s55
      %s58 = sphi 0, %s57
      %s72 = sphi 0, %s58
      %s76 = sphi 0, %s76
      %s78 = sphi 0, %s76
      %s79 = sphi 0, %s78
      %s93 = sphi 0, %s79
      %s97 = sphi 0, %s97
      %s99 = sphi 0, %s97
      %s100 = sphi 0, %s99
      %s114 = sphi 0, %s100
      %s118 = sphi 0, %s118
      %s120 = sphi 0, %s118
      %s121 = sphi 0, %s120
      %s135 = sphi 0, %s121
      %s139 = sphi 0, %s139
      %s141 = sphi 0, %s139
      %s142 = sphi 0, %s141
      %s156 = sphi 0, %s142
      %s160 = sphi 0, %s160
      %s162 = sphi 0, %s160
      %s163 = sphi 0, %s162
      %s177 = sphi 0, %s163
      %s183 = sphi 0, %s185
      %s186 = sphi 0, %s183
      %s187 = sphi 0, %s186
      %s203 = sphi 0, %s187
    $region4: #{tpu_custom_call.1} parent=1 // loop_header_branch
      %24 = sbr.rel (%p22) target = $region8
    $region5: #{tpu_custom_call.1} parent=1 // loop_body
      %s26 = ssub.s32 %s21, 1
      %s27 = ssub.s32 %s21, 2
      %s28 = sadd.s32 %s21, 1
      %s29 = ssub.s32 %s21, %s28
      %p30 = scmp.eq.s32.totalorder %s29, 0
      %s32 = sadd.s32 %s31, 1
      %s33 = scalar_select %p30, %s31, %s32
      %p36 = pneg %p30
      %p37 = scmp.eq.s32.totalorder %s21, 1
      %p38 = por %p36, %p37
      %p39 = scmp.ne.s32.totalorder %s31, %s34
      %p40 = scmp.eq.s32.totalorder %s21, 0
      %p41 = por %p39, %p40
      %p42 = scmp.ne.s32.totalorder %s31, %s34
      %p43 = scmp.eq.s32.totalorder %s26, 1
      %p44 = por %p42, %p43
      %p45 = scmp.ne.s32.totalorder %s34, %s35
      %p46 = scmp.eq.s32.totalorder %s26, 0
      %p47 = por %p45, %p46
      %p48 = scmp.ne.s32.totalorder %s34, %s35
      %p49 = scmp.eq.s32.totalorder %s27, 1
      %p50 = por %p48, %p49
      %p52 = scmp.ne.s32.totalorder %s35, %s51
      %p53 = scmp.eq.s32.totalorder %s27, 0
      %p54 = por %p52, %p53
      %s56 = sadd.s32 %s55, 1
      %p59 = scmp.eq.s32.totalorder %s21, 1
      %p60 = scmp.ne.s32.totalorder %s55, %s57
      %p61 = scmp.eq.s32.totalorder %s21, 0
      %p62 = por %p60, %p61
      %p63 = scmp.ne.s32.totalorder %s55, %s57
      %p64 = scmp.eq.s32.totalorder %s26, 1
      %p65 = por %p63, %p64
      %p66 = scmp.ne.s32.totalorder %s57, %s58
      %p67 = scmp.eq.s32.totalorder %s26, 0
      %p68 = por %p66, %p67
      %p69 = scmp.ne.s32.totalorder %s57, %s58
      %p70 = scmp.eq.s32.totalorder %s27, 1
      %p71 = por %p69, %p70
      %p73 = scmp.ne.s32.totalorder %s58, %s72
      %p74 = scmp.eq.s32.totalorder %s27, 0
      %p75 = por %p73, %p74
      %s77 = sadd.s32 %s76, 1
      %p80 = scmp.eq.s32.totalorder %s21, 1
      %p81 = scmp.ne.s32.totalorder %s76, %s78
      %p82 = scmp.eq.s32.totalorder %s21, 0
      %p83 = por %p81, %p82
      %p84 = scmp.ne.s32.totalorder %s76, %s78
      %p85 = scmp.eq.s32.totalorder %s26, 1
      %p86 = por %p84, %p85
      %p87 = scmp.ne.s32.totalorder %s78, %s79
      %p88 = scmp.eq.s32.totalorder %s26, 0
      %p89 = por %p87, %p88
      %p90 = scmp.ne.s32.totalorder %s78, %s79
      %p91 = scmp.eq.s32.totalorder %s27, 1
      %p92 = por %p90, %p91
      %p94 = scmp.ne.s32.totalorder %s79, %s93
      %p95 = scmp.eq.s32.totalorder %s27, 0
      %p96 = por %p94, %p95
      %s98 = sadd.s32 %s97, 1
      %p101 = scmp.eq.s32.totalorder %s21, 1
      %p102 = scmp.ne.s32.totalorder %s97, %s99
      %p103 = scmp.eq.s32.totalorder %s21, 0
      %p104 = por %p102, %p103
      %p105 = scmp.ne.s32.totalorder %s97, %s99
      %p106 = scmp.eq.s32.totalorder %s26, 1
      %p107 = por %p105, %p106
      %p108 = scmp.ne.s32.totalorder %s99, %s100
      %p109 = scmp.eq.s32.totalorder %s26, 0
      %p110 = por %p108, %p109
      %p111 = scmp.ne.s32.totalorder %s99, %s100
      %p112 = scmp.eq.s32.totalorder %s27, 1
      %p113 = por %p111, %p112
      %p115 = scmp.ne.s32.totalorder %s100, %s114
      %p116 = scmp.eq.s32.totalorder %s27, 0
      %p117 = por %p115, %p116
      %s119 = sadd.s32 %s118, 1
      %p122 = scmp.eq.s32.totalorder %s21, 1
      %p123 = scmp.ne.s32.totalorder %s118, %s120
      %p124 = scmp.eq.s32.totalorder %s21, 0
      %p125 = por %p123, %p124
      %p126 = scmp.ne.s32.totalorder %s118, %s120
      %p127 = scmp.eq.s32.totalorder %s26, 1
      %p128 = por %p126, %p127
      %p129 = scmp.ne.s32.totalorder %s120, %s121
      %p130 = scmp.eq.s32.totalorder %s26, 0
      %p131 = por %p129, %p130
      %p132 = scmp.ne.s32.totalorder %s120, %s121
      %p133 = scmp.eq.s32.totalorder %s27, 1
      %p134 = por %p132, %p133
      %p136 = scmp.ne.s32.totalorder %s121, %s135
      %p137 = scmp.eq.s32.totalorder %s27, 0
      %p138 = por %p136, %p137
      %s140 = sadd.s32 %s139, 1
      %p143 = scmp.eq.s32.totalorder %s21, 1
      %p144 = scmp.ne.s32.totalorder %s139, %s141
      %p145 = scmp.eq.s32.totalorder %s21, 0
      %p146 = por %p144, %p145
      %p147 = scmp.ne.s32.totalorder %s139, %s141
      %p148 = scmp.eq.s32.totalorder %s26, 1
      %p149 = por %p147, %p148
      %p150 = scmp.ne.s32.totalorder %s141, %s142
      %p151 = scmp.eq.s32.totalorder %s26, 0
      %p152 = por %p150, %p151
      %p153 = scmp.ne.s32.totalorder %s141, %s142
      %p154 = scmp.eq.s32.totalorder %s27, 1
      %p155 = por %p153, %p154
      %p157 = scmp.ne.s32.totalorder %s142, %s156
      %p158 = scmp.eq.s32.totalorder %s27, 0
      %p159 = por %p157, %p158
      %s161 = sadd.s32 %s160, 1
      %p164 = scmp.eq.s32.totalorder %s21, 1
      %p165 = scmp.ne.s32.totalorder %s160, %s162
      %p166 = scmp.eq.s32.totalorder %s21, 0
      %p167 = por %p165, %p166
      %p168 = scmp.ne.s32.totalorder %s160, %s162
      %p169 = scmp.eq.s32.totalorder %s26, 1
      %p170 = por %p168, %p169
      %p171 = scmp.ne.s32.totalorder %s162, %s163
      %p172 = scmp.eq.s32.totalorder %s26, 0
      %p173 = por %p171, %p172
      %p174 = scmp.ne.s32.totalorder %s162, %s163
      %p175 = scmp.eq.s32.totalorder %s27, 1
      %p176 = por %p174, %p175
      %p178 = scmp.ne.s32.totalorder %s163, %s177
      %p179 = scmp.eq.s32.totalorder %s27, 0
      %p180 = por %p178, %p179
      %s181 = ssub.s32 %s21, %s28
      %p182 = scmp.eq.s32.totalorder %s181, 0
      %s184 = sadd.s32 %s183, 1
      %s185 = scalar_select %p182, %s183, %s184
      %p188 = pneg %p182
      %p189 = scmp.eq.s32.totalorder %s21, 1
      %p190 = por %p188, %p189
      %p191 = scmp.ne.s32.totalorder %s183, %s186
      %p192 = scmp.eq.s32.totalorder %s21, 0
      %p193 = por %p191, %p192
      %p194 = scmp.ne.s32.totalorder %s183, %s186
      %p195 = scmp.eq.s32.totalorder %s26, 1
      %p196 = por %p194, %p195
      %p197 = scmp.ne.s32.totalorder %s186, %s187
      %p198 = scmp.eq.s32.totalorder %s26, 0
      %p199 = por %p197, %p198
      %p200 = scmp.ne.s32.totalorder %s186, %s187
      %p201 = scmp.eq.s32.totalorder %s27, 1
      %p202 = por %p200, %p201
      %p204 = scmp.ne.s32.totalorder %s187, %s203
      %p205 = scmp.eq.s32.totalorder %s27, 0
      %p206 = por %p204, %p205
      %p207 = scmp.le.s32.totalorder 1, %s21
      %p208 = scmp.lt.s32.totalorder %s21, 3
      %p209 = pnand %p207, %p208
      %p210 = pneg %p209
      // Predicated region
      $region9: #{tpu_custom_call.1} parent=5 // pred_check
        _
      $region10: #{tpu_custom_call.1} parent=5 // pred_check_branch
        %212 = sbr.rel (%p209) target = $region12
      $region11: #{tpu_custom_call.1} parent=5 // pred_region
        %s213 = ssub.s32 %s21, 1
        // Predicated region
        $region13: #{tpu_custom_call.1} parent=11 // pred_check
          %p214 = pneg %p68
        $region14: #{tpu_custom_call.1} parent=11 // pred_check_branch
          %216 = sbr.rel (%p214) target = $region16
        $region15: #{tpu_custom_call.1} parent=11 // pred_region
          _
        $region16: #{tpu_custom_call.1} parent=11 // pred_fallthru
          _
        // Predicated region
        $region17: #{tpu_custom_call.1} parent=11 // pred_check
          %p217 = pneg %p89
        $region18: #{tpu_custom_call.1} parent=11 // pred_check_branch
          %219 = sbr.rel (%p217) target = $region20
        $region19: #{tpu_custom_call.1} parent=11 // pred_region
          %s221 = ssub.s32 256, 256
          %222 = vsyncadd [#allocation8], %s221
          %s223 = sshll.u32 [#allocation7], 4
          %s224 = int_to_ptr.vmem [resolvable:$true] %s223
          %229 = dma.hbm_to_vmem [thread:$0]  %s2, 256, %s224, [#allocation8], 128, 128, 8
        $region20: #{tpu_custom_call.1} parent=11 // pred_fallthru
          _
        // Predicated region
        $region21: #{tpu_custom_call.1} parent=11 // pred_check
          %p230 = pneg %p110
        $region22: #{tpu_custom_call.1} parent=11 // pred_check_branch
          %232 = sbr.rel (%p230) target = $region24
        $region23: #{tpu_custom_call.1} parent=11 // pred_region
          %s234 = ssub.s32 2048, 2048
          %235 = vsyncadd [#allocation8], %s234
          %s236 = sshll.u32 [#allocation9], 4
          %s237 = int_to_ptr.vmem [resolvable:$true] %s236
          %242 = dma.hbm_to_vmem [thread:$0]  %s3, 2048, %s237, [#allocation8], 256, 256, 16
        $region24: #{tpu_custom_call.1} parent=11 // pred_fallthru
          _
        // Predicated region
        $region25: #{tpu_custom_call.1} parent=11 // pred_check
          %p243 = pneg %p131
        $region26: #{tpu_custom_call.1} parent=11 // pred_check_branch
          %245 = sbr.rel (%p243) target = $region28
        $region27: #{tpu_custom_call.1} parent=11 // pred_region
          _
        $region28: #{tpu_custom_call.1} parent=11 // pred_fallthru
          _
        // Predicated region
        $region29: #{tpu_custom_call.1} parent=11 // pred_check
          %p246 = pneg %p152
        $region30: #{tpu_custom_call.1} parent=11 // pred_check_branch
          %248 = sbr.rel (%p246) target = $region32
        $region31: #{tpu_custom_call.1} parent=11 // pred_region
          %s250 = ssub.s32 512, 512
          %251 = vsyncadd [#allocation11], %s250
          %s252 = sshll.u32 [#allocation10], 4
          %s253 = int_to_ptr.vmem [resolvable:$true] %s252
          %258 = dma.hbm_to_vmem [thread:$0]  %s5, 512, %s253, [#allocation11], 128, 128, 8
        $region32: #{tpu_custom_call.1} parent=11 // pred_fallthru
          _
        // Predicated region
        $region33: #{tpu_custom_call.1} parent=11 // pred_check
          %p259 = pneg %p173
        $region34: #{tpu_custom_call.1} parent=11 // pred_check_branch
          %261 = sbr.rel (%p259) target = $region36
        $region35: #{tpu_custom_call.1} parent=11 // pred_region
          _
        $region36: #{tpu_custom_call.1} parent=11 // pred_fallthru
          _
      $region12: #{tpu_custom_call.1} parent=5 // pred_fallthru
        _
      %p262 = scmp.lt.s32.totalorder %s21, 2
      // Predicated region
      $region37: #{tpu_custom_call.1} parent=5 // pred_check
        %p263 = pneg %p262
      $region38: #{tpu_custom_call.1} parent=5 // pred_check_branch
        %265 = sbr.rel (%p263) target = $region40
      $region39: #{tpu_custom_call.1} parent=5 // pred_region
        // Predicated region
        $region41: #{tpu_custom_call.1} parent=39 // pred_check
          %p266 = pneg %p41
        $region42: #{tpu_custom_call.1} parent=39 // pred_check_branch
          %268 = sbr.rel (%p266) target = $region44
        $region43: #{tpu_custom_call.1} parent=39 // pred_region
          %s269 = sand.u32 %s31, 1
          %s270 = scalar_lea.sflag [#allocation5], %s269
          %s271 = sand.u32 %s31, 1
          %s272 = smul.addr %s271, 48
          %s273 = scalar_lea.vmem [#allocation4], %s272
          %s275 = ssub.s32 768, 768
          %276 = vsyncadd %s270, %s275
          %s277 = smul.addr %s21, 6
          %s278 = smul.addr %s277, 128
          %s279 = scalar_lea.hbm %s0, %s278
          %s280 = sshll.u32 %s273, 4
          %s281 = int_to_ptr.vmem [resolvable:$true] %s280
          %286 = dma.hbm_to_vmem [thread:$0]  %s279, 768, %s281, %s270, 128, 128, 8
        $region44: #{tpu_custom_call.1} parent=39 // pred_fallthru
          _
      $region40: #{tpu_custom_call.1} parent=5 // pred_fallthru
        _
      %p287 = scmp.le.s32.totalorder 1, %s21
      %p288 = scmp.lt.s32.totalorder %s21, 3
      %p289 = pnand %p287, %p288
      %p290 = pneg %p289
      // Predicated region
      $region45: #{tpu_custom_call.1} parent=5 // pred_check
        _
      $region46: #{tpu_custom_call.1} parent=5 // pred_check_branch
        %292 = sbr.rel (%p289) target = $region48
      $region47: #{tpu_custom_call.1} parent=5 // pred_region
        %s293 = ssub.s32 %s21, 1
        %s294 = sand.u32 %s34, 1
        %s295 = scalar_lea.sflag [#allocation5], %s294
        %s296 = sand.u32 %s34, 1
        %s297 = smul.addr %s296, 48
        %s298 = scalar_lea.vmem [#allocation4], %s297
        // Predicated region
        $region49: #{tpu_custom_call.1} parent=47 // pred_check
          %p299 = pneg %p47
        $region50: #{tpu_custom_call.1} parent=47 // pred_check_branch
          %301 = sbr.rel (%p299) target = $region52
        $region51: #{tpu_custom_call.1} parent=47 // pred_region
          %302 = dma.done %s295, 768
        $region52: #{tpu_custom_call.1} parent=47 // pred_fallthru
          _
        // Predicated region
        $region53: #{tpu_custom_call.1} parent=47 // pred_check
          %p303 = pneg %p89
        $region54: #{tpu_custom_call.1} parent=47 // pred_check_branch
          %305 = sbr.rel (%p303) target = $region56
        $region55: #{tpu_custom_call.1} parent=47 // pred_region
          %306 = dma.done [#allocation8], 256
        $region56: #{tpu_custom_call.1} parent=47 // pred_fallthru
          _
        // Predicated region
        $region57: #{tpu_custom_call.1} parent=47 // pred_check
          %p307 = pneg %p110
        $region58: #{tpu_custom_call.1} parent=47 // pred_check_branch
          %309 = sbr.rel (%p307) target = $region60
        $region59: #{tpu_custom_call.1} parent=47 // pred_region
          %310 = dma.done [#allocation8], 2048
        $region60: #{tpu_custom_call.1} parent=47 // pred_fallthru
          _
        // Predicated region
        $region61: #{tpu_custom_call.1} parent=47 // pred_check
          %p311 = pneg %p152
        $region62: #{tpu_custom_call.1} parent=47 // pred_check_branch
          %313 = sbr.rel (%p311) target = $region64
        $region63: #{tpu_custom_call.1} parent=47 // pred_region
          %314 = dma.done [#allocation11], 512
        $region64: #{tpu_custom_call.1} parent=47 // pred_fallthru
          _
        %s315 = sand.u32 %s34, 1
        %s316 = scalar_lea.sflag [#allocation5], %s315
        %s317 = sand.u32 %s34, 1
        %s318 = smul.addr %s317, 48
        %s319 = scalar_lea.vmem [#allocation4], %s318
        %p320 = pneg %p47
        %p321 = pneg %p44
        %p322 = pneg %p68
        %p323 = pneg %p65
        %p324 = pneg %p89
        %p325 = pneg %p86
        %p326 = pneg %p110
        %p327 = pneg %p107
        %p328 = pneg %p131
        %p329 = pneg %p128
        %p330 = pneg %p152
        %p331 = pneg %p149
        %p332 = pneg %p173
        %p333 = pneg %p170
        %p334 = pneg %p199
        %p335 = pneg %p196
        %s336 = sand.u32 %s186, 1
        %s337 = scalar_lea.sflag [#allocation6], %s336
        %s338 = sand.u32 %s186, 1
        %s339 = smul.addr %s338, 1152
        %s340 = scalar_lea.vmem [#allocation12], %s339
        %vm341 = vcmask 326656
        %342 = vst.msk [vmem:[#allocation2] sm:$0xff] %vm341, 0.0
        %343 = vst.msk [vmem:[#allocation2 + $0x8] sm:$0xff] %vm341, 0.0
        %344 = vst.msk [vmem:[#allocation2 + $0x10] sm:$0xff] %vm341, 0.0
        %345 = vst.msk [vmem:[#allocation2 + $0x18] sm:$0xff] %vm341, 0.0
        %346 = vst.msk [vmem:[#allocation2 + $0x20] sm:$0xff] %vm341, 0.0
        %347 = vst.msk [vmem:[#allocation2 + $0x28] sm:$0xff] %vm341, 0.0
        %348 = vst.msk [vmem:[#allocation2 + $0x30] sm:$0xff] %vm341, 0.0
        %349 = vst.msk [vmem:[#allocation2 + $0x38] sm:$0xff] %vm341, 0.0
        %350 = vst.msk [vmem:[#allocation2 + $0x40] sm:$0xff] %vm341, 0.0
        %351 = vst.msk [vmem:[#allocation2 + $0x48] sm:$0xff] %vm341, 0.0
        %352 = vst.msk [vmem:[#allocation2 + $0x50] sm:$0xff] %vm341, 0.0
        %353 = vst.msk [vmem:[#allocation2 + $0x58] sm:$0xff] %vm341, 0.0
        %354 = vst.msk [vmem:[#allocation2 + $0x60] sm:$0xff] %vm341, 0.0
        %355 = vst.msk [vmem:[#allocation2 + $0x68] sm:$0xff] %vm341, 0.0
        %356 = vst.msk [vmem:[#allocation2 + $0x70] sm:$0xff] %vm341, 0.0
        %vm357 = vcmask 261120
        %358 = vst.msk [vmem:[#allocation3] sm:$0xff] %vm357, 0.0
        %359 = vst.msk [vmem:[#allocation3 + $0x8] sm:$0xff] %vm357, 0.0
        %360 = vst.msk [vmem:[#allocation3 + $0x10] sm:$0xff] %vm357, 0.0
        %361 = vst.msk [vmem:[#allocation3 + $0x18] sm:$0xff] %vm357, 0.0
        %362 = vst.msk [vmem:[#allocation3 + $0x20] sm:$0xff] %vm357, 0.0
        %363 = vst.msk [vmem:[#allocation3 + $0x28] sm:$0xff] %vm357, 0.0
        %364 = vst.msk [vmem:[#allocation3 + $0x30] sm:$0xff] %vm357, 0.0
        %365 = vst.msk [vmem:[#allocation3 + $0x38] sm:$0xff] %vm357, 0.0
        %366 = vst.msk [vmem:[#allocation3 + $0x40] sm:$0xff] %vm357, 0.0
        %367 = vst.msk [vmem:[#allocation3 + $0x48] sm:$0xff] %vm357, 0.0
        %368 = vst.msk [vmem:[#allocation3 + $0x50] sm:$0xff] %vm357, 0.0
        %369 = vst.msk [vmem:[#allocation3 + $0x58] sm:$0xff] %vm357, 0.0
        %370 = vst.msk [vmem:[#allocation3 + $0x60] sm:$0xff] %vm357, 0.0
        %371 = vst.msk [vmem:[#allocation3 + $0x68] sm:$0xff] %vm357, 0.0
        %372 = vst.msk [vmem:[#allocation3 + $0x70] sm:$0xff] %vm357, 0.0
        %373 = vst.msk [vmem:[#allocation3 + $0x78] sm:$0xff] %vm357, 0.0
        %374 = vst.msk [vmem:[#allocation3 + $0x80] sm:$0xff] %vm357, 0.0
        %375 = vst.msk [vmem:[#allocation3 + $0x88] sm:$0xff] %vm357, 0.0
        %376 = vst.msk [vmem:[#allocation3 + $0x90] sm:$0xff] %vm357, 0.0
        %377 = vst.msk [vmem:[#allocation3 + $0x98] sm:$0xff] %vm357, 0.0
        %378 = vst.msk [vmem:[#allocation3 + $0xa0] sm:$0xff] %vm357, 0.0
        %379 = vst.msk [vmem:[#allocation3 + $0xa8] sm:$0xff] %vm357, 0.0
        %380 = vst.msk [vmem:[#allocation3 + $0xb0] sm:$0xff] %vm357, 0.0
        %381 = vst.msk [vmem:[#allocation3 + $0xb8] sm:$0xff] %vm357, 0.0
        %382 = vst.msk [vmem:[#allocation3 + $0xc0] sm:$0xff] %vm357, 0.0
        %383 = vst.msk [vmem:[#allocation3 + $0xc8] sm:$0xff] %vm357, 0.0
        %384 = vst.msk [vmem:[#allocation3 + $0xd0] sm:$0xff] %vm357, 0.0
        %385 = vst.msk [vmem:[#allocation3 + $0xd8] sm:$0xff] %vm357, 0.0
        %386 = vst.msk [vmem:[#allocation3 + $0xe0] sm:$0xff] %vm357, 0.0
        %387 = vst.msk [vmem:[#allocation3 + $0xe8] sm:$0xff] %vm357, 0.0
        %388 = vst.msk [vmem:[#allocation3 + $0xf0] sm:$0xff] %vm357, 0.0
        %389 = vst.msk [vmem:[#allocation3 + $0xf8] sm:$0xff] %vm357, 0.0
        %vm390 = vcmask 293888
        %391 = vst.msk [vmem:[%s340] sm:$0xff] %vm390, 0.0
        %392 = vst.msk [vmem:[%s340 + $0x8] sm:$0xff] %vm390, 0.0
        %393 = vst.msk [vmem:[%s340 + $0x10] sm:$0xff] %vm390, 0.0
        %394 = vst.msk [vmem:[%s340 + $0x18] sm:$0xff] %vm390, 0.0
        %395 = vst.msk [vmem:[%s340 + $0x20] sm:$0xff] %vm390, 0.0
        %396 = vst.msk [vmem:[%s340 + $0x28] sm:$0xff] %vm390, 0.0
        %397 = vst.msk [vmem:[%s340 + $0x30] sm:$0xff] %vm390, 0.0
        %398 = vst.msk [vmem:[%s340 + $0x38] sm:$0xff] %vm390, 0.0
        %399 = vst.msk [vmem:[%s340 + $0x40] sm:$0xff] %vm390, 0.0
        %400 = vst.msk [vmem:[%s340 + $0x48] sm:$0xff] %vm390, 0.0
        %401 = vst.msk [vmem:[%s340 + $0x50] sm:$0xff] %vm390, 0.0
        %402 = vst.msk [vmem:[%s340 + $0x58] sm:$0xff] %vm390, 0.0
        %403 = vst.msk [vmem:[%s340 + $0x60] sm:$0xff] %vm390, 0.0
        %404 = vst.msk [vmem:[%s340 + $0x68] sm:$0xff] %vm390, 0.0
        %405 = vst.msk [vmem:[%s340 + $0x70] sm:$0xff] %vm390, 0.0
        %406 = vst.msk [vmem:[%s340 + $0x78] sm:$0xff] %vm390, 0.0
        %407 = vst.msk [vmem:[%s340 + $0x80] sm:$0xff] %vm390, 0.0
        %408 = vst.msk [vmem:[%s340 + $0x88] sm:$0xff] %vm390, 0.0
        %409 = vst.msk [vmem:[%s340 + $0x90] sm:$0xff] %vm390, 0.0
        %410 = vst.msk [vmem:[%s340 + $0x98] sm:$0xff] %vm390, 0.0
        %411 = vst.msk [vmem:[%s340 + $0xa0] sm:$0xff] %vm390, 0.0
        %412 = vst.msk [vmem:[%s340 + $0xa8] sm:$0xff] %vm390, 0.0
        %413 = vst.msk [vmem:[%s340 + $0xb0] sm:$0xff] %vm390, 0.0
        %414 = vst.msk [vmem:[%s340 + $0xb8] sm:$0xff] %vm390, 0.0
        %415 = vst.msk [vmem:[%s340 + $0xc0] sm:$0xff] %vm390, 0.0
        %416 = vst.msk [vmem:[%s340 + $0xc8] sm:$0xff] %vm390, 0.0
        %417 = vst.msk [vmem:[%s340 + $0xd0] sm:$0xff] %vm390, 0.0
        %418 = vst.msk [vmem:[%s340 + $0xd8] sm:$0xff] %vm390, 0.0
        %419 = vst.msk [vmem:[%s340 + $0xe0] sm:$0xff] %vm390, 0.0
        %420 = vst.msk [vmem:[%s340 + $0xe8] sm:$0xff] %vm390, 0.0
        %421 = vst.msk [vmem:[%s340 + $0xf0] sm:$0xff] %vm390, 0.0
        %422 = vst.msk [vmem:[%s340 + $0xf8] sm:$0xff] %vm390, 0.0
        %423 = vst.msk [vmem:[%s340 + $0x100] sm:$0xff] %vm390, 0.0
        %424 = vst.msk [vmem:[%s340 + $0x108] sm:$0xff] %vm390, 0.0
        %425 = vst.msk [vmem:[%s340 + $0x110] sm:$0xff] %vm390, 0.0
        %426 = vst.msk [vmem:[%s340 + $0x118] sm:$0xff] %vm390, 0.0
        %427 = vst.msk [vmem:[%s340 + $0x120] sm:$0xff] %vm390, 0.0
        %428 = vst.msk [vmem:[%s340 + $0x128] sm:$0xff] %vm390, 0.0
        %429 = vst.msk [vmem:[%s340 + $0x130] sm:$0xff] %vm390, 0.0
        %430 = vst.msk [vmem:[%s340 + $0x138] sm:$0xff] %vm390, 0.0
        %431 = vst.msk [vmem:[%s340 + $0x140] sm:$0xff] %vm390, 0.0
        %432 = vst.msk [vmem:[%s340 + $0x148] sm:$0xff] %vm390, 0.0
        %433 = vst.msk [vmem:[%s340 + $0x150] sm:$0xff] %vm390, 0.0
        %434 = vst.msk [vmem:[%s340 + $0x158] sm:$0xff] %vm390, 0.0
        %435 = vst.msk [vmem:[%s340 + $0x160] sm:$0xff] %vm390, 0.0
        %436 = vst.msk [vmem:[%s340 + $0x168] sm:$0xff] %vm390, 0.0
        %437 = vst.msk [vmem:[%s340 + $0x170] sm:$0xff] %vm390, 0.0
        %438 = vst.msk [vmem:[%s340 + $0x178] sm:$0xff] %vm390, 0.0
        %439 = vst.msk [vmem:[%s340 + $0x180] sm:$0xff] %vm390, 0.0
        %440 = vst.msk [vmem:[%s340 + $0x188] sm:$0xff] %vm390, 0.0
        %441 = vst.msk [vmem:[%s340 + $0x190] sm:$0xff] %vm390, 0.0
        %442 = vst.msk [vmem:[%s340 + $0x198] sm:$0xff] %vm390, 0.0
        %443 = vst.msk [vmem:[%s340 + $0x1a0] sm:$0xff] %vm390, 0.0
        %444 = vst.msk [vmem:[%s340 + $0x1a8] sm:$0xff] %vm390, 0.0
        %445 = vst.msk [vmem:[%s340 + $0x1b0] sm:$0xff] %vm390, 0.0
        %446 = vst.msk [vmem:[%s340 + $0x1b8] sm:$0xff] %vm390, 0.0
        %447 = vst.msk [vmem:[%s340 + $0x1c0] sm:$0xff] %vm390, 0.0
        %448 = vst.msk [vmem:[%s340 + $0x1c8] sm:$0xff] %vm390, 0.0
        %449 = vst.msk [vmem:[%s340 + $0x1d0] sm:$0xff] %vm390, 0.0
        %450 = vst.msk [vmem:[%s340 + $0x1d8] sm:$0xff] %vm390, 0.0
        %451 = vst.msk [vmem:[%s340 + $0x1e0] sm:$0xff] %vm390, 0.0
        %452 = vst.msk [vmem:[%s340 + $0x1e8] sm:$0xff] %vm390, 0.0
        %453 = vst.msk [vmem:[%s340 + $0x1f0] sm:$0xff] %vm390, 0.0
        %454 = vst.msk [vmem:[%s340 + $0x1f8] sm:$0xff] %vm390, 0.0
        %455 = vst.msk [vmem:[%s340 + $0x200] sm:$0xff] %vm390, 0.0
        %456 = vst.msk [vmem:[%s340 + $0x208] sm:$0xff] %vm390, 0.0
        %457 = vst.msk [vmem:[%s340 + $0x210] sm:$0xff] %vm390, 0.0
        %458 = vst.msk [vmem:[%s340 + $0x218] sm:$0xff] %vm390, 0.0
        %459 = vst.msk [vmem:[%s340 + $0x220] sm:$0xff] %vm390, 0.0
        %460 = vst.msk [vmem:[%s340 + $0x228] sm:$0xff] %vm390, 0.0
        %461 = vst.msk [vmem:[%s340 + $0x230] sm:$0xff] %vm390, 0.0
        %462 = vst.msk [vmem:[%s340 + $0x238] sm:$0xff] %vm390, 0.0
        %463 = vst.msk [vmem:[%s340 + $0x240] sm:$0xff] %vm390, 0.0
        %464 = vst.msk [vmem:[%s340 + $0x248] sm:$0xff] %vm390, 0.0
        %465 = vst.msk [vmem:[%s340 + $0x250] sm:$0xff] %vm390, 0.0
        %466 = vst.msk [vmem:[%s340 + $0x258] sm:$0xff] %vm390, 0.0
        %467 = vst.msk [vmem:[%s340 + $0x260] sm:$0xff] %vm390, 0.0
        %468 = vst.msk [vmem:[%s340 + $0x268] sm:$0xff] %vm390, 0.0
        %469 = vst.msk [vmem:[%s340 + $0x270] sm:$0xff] %vm390, 0.0
        %470 = vst.msk [vmem:[%s340 + $0x278] sm:$0xff] %vm390, 0.0
        %471 = vst.msk [vmem:[%s340 + $0x280] sm:$0xff] %vm390, 0.0
        %472 = vst.msk [vmem:[%s340 + $0x288] sm:$0xff] %vm390, 0.0
        %473 = vst.msk [vmem:[%s340 + $0x290] sm:$0xff] %vm390, 0.0
        %474 = vst.msk [vmem:[%s340 + $0x298] sm:$0xff] %vm390, 0.0
        %475 = vst.msk [vmem:[%s340 + $0x2a0] sm:$0xff] %vm390, 0.0
        %476 = vst.msk [vmem:[%s340 + $0x2a8] sm:$0xff] %vm390, 0.0
        %477 = vst.msk [vmem:[%s340 + $0x2b0] sm:$0xff] %vm390, 0.0
        %478 = vst.msk [vmem:[%s340 + $0x2b8] sm:$0xff] %vm390, 0.0
        %479 = vst.msk [vmem:[%s340 + $0x2c0] sm:$0xff] %vm390, 0.0
        %480 = vst.msk [vmem:[%s340 + $0x2c8] sm:$0xff] %vm390, 0.0
        %481 = vst.msk [vmem:[%s340 + $0x2d0] sm:$0xff] %vm390, 0.0
        %482 = vst.msk [vmem:[%s340 + $0x2d8] sm:$0xff] %vm390, 0.0
        %483 = vst.msk [vmem:[%s340 + $0x2e0] sm:$0xff] %vm390, 0.0
        %484 = vst.msk [vmem:[%s340 + $0x2e8] sm:$0xff] %vm390, 0.0
        %485 = vst.msk [vmem:[%s340 + $0x2f0] sm:$0xff] %vm390, 0.0
        %486 = vst.msk [vmem:[%s340 + $0x2f8] sm:$0xff] %vm390, 0.0
        %487 = vst.msk [vmem:[%s340 + $0x300] sm:$0xff] %vm390, 0.0
        %488 = vst.msk [vmem:[%s340 + $0x308] sm:$0xff] %vm390, 0.0
        %489 = vst.msk [vmem:[%s340 + $0x310] sm:$0xff] %vm390, 0.0
        %490 = vst.msk [vmem:[%s340 + $0x318] sm:$0xff] %vm390, 0.0
        %491 = vst.msk [vmem:[%s340 + $0x320] sm:$0xff] %vm390, 0.0
        %492 = vst.msk [vmem:[%s340 + $0x328] sm:$0xff] %vm390, 0.0
        %493 = vst.msk [vmem:[%s340 + $0x330] sm:$0xff] %vm390, 0.0
        %494 = vst.msk [vmem:[%s340 + $0x338] sm:$0xff] %vm390, 0.0
        %495 = vst.msk [vmem:[%s340 + $0x340] sm:$0xff] %vm390, 0.0
        %496 = vst.msk [vmem:[%s340 + $0x348] sm:$0xff] %vm390, 0.0
        %497 = vst.msk [vmem:[%s340 + $0x350] sm:$0xff] %vm390, 0.0
        %498 = vst.msk [vmem:[%s340 + $0x358] sm:$0xff] %vm390, 0.0
        %499 = vst.msk [vmem:[%s340 + $0x360] sm:$0xff] %vm390, 0.0
        %500 = vst.msk [vmem:[%s340 + $0x368] sm:$0xff] %vm390, 0.0
        %501 = vst.msk [vmem:[%s340 + $0x370] sm:$0xff] %vm390, 0.0
        %502 = vst.msk [vmem:[%s340 + $0x378] sm:$0xff] %vm390, 0.0
        %503 = vst.msk [vmem:[%s340 + $0x380] sm:$0xff] %vm390, 0.0
        %504 = vst.msk [vmem:[%s340 + $0x388] sm:$0xff] %vm390, 0.0
        %505 = vst.msk [vmem:[%s340 + $0x390] sm:$0xff] %vm390, 0.0
        %506 = vst.msk [vmem:[%s340 + $0x398] sm:$0xff] %vm390, 0.0
        %507 = vst.msk [vmem:[%s340 + $0x3a0] sm:$0xff] %vm390, 0.0
        %508 = vst.msk [vmem:[%s340 + $0x3a8] sm:$0xff] %vm390, 0.0
        %509 = vst.msk [vmem:[%s340 + $0x3b0] sm:$0xff] %vm390, 0.0
        %510 = vst.msk [vmem:[%s340 + $0x3b8] sm:$0xff] %vm390, 0.0
        %511 = vst.msk [vmem:[%s340 + $0x3c0] sm:$0xff] %vm390, 0.0
        %512 = vst.msk [vmem:[%s340 + $0x3c8] sm:$0xff] %vm390, 0.0
        %513 = vst.msk [vmem:[%s340 + $0x3d0] sm:$0xff] %vm390, 0.0
        %514 = vst.msk [vmem:[%s340 + $0x3d8] sm:$0xff] %vm390, 0.0
        %515 = vst.msk [vmem:[%s340 + $0x3e0] sm:$0xff] %vm390, 0.0
        %516 = vst.msk [vmem:[%s340 + $0x3e8] sm:$0xff] %vm390, 0.0
        %517 = vst.msk [vmem:[%s340 + $0x3f0] sm:$0xff] %vm390, 0.0
        %518 = vst.msk [vmem:[%s340 + $0x3f8] sm:$0xff] %vm390, 0.0
        %519 = vst.msk [vmem:[%s340 + $0x400] sm:$0xff] %vm390, 0.0
        %520 = vst.msk [vmem:[%s340 + $0x408] sm:$0xff] %vm390, 0.0
        %521 = vst.msk [vmem:[%s340 + $0x410] sm:$0xff] %vm390, 0.0
        %522 = vst.msk [vmem:[%s340 + $0x418] sm:$0xff] %vm390, 0.0
        %523 = vst.msk [vmem:[%s340 + $0x420] sm:$0xff] %vm390, 0.0
        %524 = vst.msk [vmem:[%s340 + $0x428] sm:$0xff] %vm390, 0.0
        %525 = vst.msk [vmem:[%s340 + $0x430] sm:$0xff] %vm390, 0.0
        %526 = vst.msk [vmem:[%s340 + $0x438] sm:$0xff] %vm390, 0.0
        %527 = vst.msk [vmem:[%s340 + $0x440] sm:$0xff] %vm390, 0.0
        %528 = vst.msk [vmem:[%s340 + $0x448] sm:$0xff] %vm390, 0.0
        %529 = vst.msk [vmem:[%s340 + $0x450] sm:$0xff] %vm390, 0.0
        %530 = vst.msk [vmem:[%s340 + $0x458] sm:$0xff] %vm390, 0.0
        %531 = vst.msk [vmem:[%s340 + $0x460] sm:$0xff] %vm390, 0.0
        %532 = vst.msk [vmem:[%s340 + $0x468] sm:$0xff] %vm390, 0.0
        %533 = vst.msk [vmem:[%s340 + $0x470] sm:$0xff] %vm390, 0.0
        %534 = vst.msk [vmem:[%s340 + $0x478] sm:$0xff] %vm390, 0.0
        %v535 = vld [vmem:[%s298] sm:$0xff]
        %v536 = vld [vmem:[%s298 + $0x8] sm:$0xff]
        %v537 = vld [vmem:[#allocation7] sm:$0xff]
        %v538 = vld [vmem:[#allocation7 + $0x8] sm:$0xff]
        %vm539 = vcmask 130048
        %v541 = vsel %vm539, %v535, 0
        %v544 = vsel %vm539, %v536, 0
        %546 = vmatprep.subr.mxu0 0.0
        %547 = vmatpush1.msra.mxu0 %v537
        %548 = vmatprep.subr.mxu0 0.0
        %549 = vmatpush1.msra.mxu0 %v538
        %550 = vmatprep.subr.mxu0 0.0
        %551 = vmatpush1.msra.mxu0 0.0
        %552 = vmatprep.subr.mxu0 0.0
        %553 = vmatpush1.msra.mxu0 0.0
        %554 = vmatprep.subr.mxu0 0.0
        %555 = vmatpush1.msra.mxu0 0.0
        %556 = vmatprep.subr.mxu0 0.0
        %557 = vmatpush1.msra.mxu0 0.0
        %558 = vmatprep.subr.mxu0 0.0
        %559 = vmatpush1.msra.mxu0 0.0
        %560 = vmatprep.subr.mxu0 0.0
        %561 = vmatpush1.msra.mxu0 0.0
        %562 = vmatprep.subr.mxu0 0.0
        %563 = vmatpush1.msra.mxu0 0.0
        %564 = vmatprep.subr.mxu0 0.0
        %565 = vmatpush1.msra.mxu0 0.0
        %566 = vmatprep.subr.mxu0 0.0
        %567 = vmatpush1.msra.mxu0 0.0
        %568 = vmatprep.subr.mxu0 0.0
        %569 = vmatpush1.msra.mxu0 0.0
        %570 = vmatprep.subr.mxu0 0.0
        %571 = vmatpush1.msra.mxu0 0.0
        %572 = vmatprep.subr.mxu0 0.0
        %573 = vmatpush1.msra.mxu0 0.0
        %574 = vmatprep.subr.mxu0 0.0
        %575 = vmatpush1.msra.mxu0 0.0
        %576 = vmatprep.subr.mxu0 0.0
        %577 = vmatpush1.msra.mxu0 0.0
        %578 = vmatprep.subr.mxu0 0.0
        %579 = vmatpush1.msra.mxu0 0.0
        %580 = vmatprep.subr.mxu0 0.0
        %581 = vmatpush1.msra.mxu0 0.0
        %582 = vmatprep.subr.mxu0 0.0
        %583 = vmatpush1.msra.mxu0 0.0
        %584 = vmatprep.subr.mxu0 0.0
        %585 = vmatpush1.msra.mxu0 0.0
        %586 = vmatprep.subr.mxu0 0.0
        %587 = vmatpush1.msra.mxu0 0.0
        %588 = vmatprep.subr.mxu0 0.0
        %589 = vmatpush1.msra.mxu0 0.0
        %590 = vmatprep.subr.mxu0 0.0
        %591 = vmatpush1.msra.mxu0 0.0
        %592 = vmatprep.subr.mxu0 0.0
        %593 = vmatpush1.msra.mxu0 0.0
        %594 = vmatprep.subr.mxu0 0.0
        %595 = vmatpush1.msra.mxu0 0.0
        %596 = vmatprep.subr.mxu0 0.0
        %597 = vmatpush1.msra.mxu0 0.0
        %598 = vmatprep.subr.mxu0 0.0
        %599 = vmatpush1.msra.mxu0 0.0
        %600 = vmatprep.subr.mxu0 0.0
        %601 = vmatpush1.msra.mxu0 0.0
        %602 = vmatprep.subr.mxu0 0.0
        %603 = vmatpush1.msra.mxu0 0.0
        %604 = vmatprep.subr.mxu0 0.0
        %605 = vmatpush1.msra.mxu0 0.0
        %606 = vmatprep.subr.mxu0 0.0
        %607 = vmatpush1.msra.mxu0 0.0
        %608 = vmatprep.subr.mxu0 0.0
        %609 = vmatpush1.msra.mxu0 0.0
        %610 = vmatprep.mubr.f32.mxu0 0.0
        %611 = vmatmul.mubr.f32.gmra.mrb[0].mxu0 %v541
        %v612 = vpop.f32.mrb[0].mxu0
        %v613 = vadd.f32 0.0, %v612
        %v614 = vpop.f32.mrb[0].mxu0
        %615 = vmatprep.mubr.f32.mxu0 0.0
        %616 = vmatmul.mubr.f32.gmra.mrb[0].mxu0 %v544
        %v617 = vpop.f32.mrb[0].mxu0
        %v618 = vadd.f32 0.0, %v617
        %v619 = vpop.f32.mrb[0].mxu0
        %620 = vdwg.mxu0
        %v621 = vld [vmem:[%s1] sm:$0xff]
        %v622 = vld [vmem:[%s1 + $0x8] sm:$0xff]
        %v623 = vld [vmem:[%s1 + $0x10] sm:$0xff]
        %v624 = vld [vmem:[%s1 + $0x18] sm:$0xff]
        %v626 = vsel %vm539, %v621, 0
        %v629 = vsel %vm539, %v622, 0
        %v632 = vsel %vm539, %v623, 0
        %v635 = vsel %vm539, %v624, 0
        %637 = vmatprep.subr.mxu0 0.0
        %638 = vmatpush1.msra.mxu0 %v613
        %639 = vmatprep.subr.mxu0 0.0
        %640 = vmatpush1.msra.mxu0 %v618
        %641 = vmatprep.subr.mxu0 0.0
        %642 = vmatpush1.msra.mxu0 0.0
        %643 = vmatprep.subr.mxu0 0.0
        %644 = vmatpush1.msra.mxu0 0.0
        %645 = vmatprep.subr.mxu0 0.0
        %646 = vmatpush1.msra.mxu0 0.0
        %647 = vmatprep.subr.mxu0 0.0
        %648 = vmatpush1.msra.mxu0 0.0
        %649 = vmatprep.subr.mxu0 0.0
        %650 = vmatpush1.msra.mxu0 0.0
        %651 = vmatprep.subr.mxu0 0.0
        %652 = vmatpush1.msra.mxu0 0.0
        %653 = vmatprep.subr.mxu0 0.0
        %654 = vmatpush1.msra.mxu0 0.0
        %655 = vmatprep.subr.mxu0 0.0
        %656 = vmatpush1.msra.mxu0 0.0
        %657 = vmatprep.subr.mxu0 0.0
        %658 = vmatpush1.msra.mxu0 0.0
        %659 = vmatprep.subr.mxu0 0.0
        %660 = vmatpush1.msra.mxu0 0.0
        %661 = vmatprep.subr.mxu0 0.0
        %662 = vmatpush1.msra.mxu0 0.0
        %663 = vmatprep.subr.mxu0 0.0
        %664 = vmatpush1.msra.mxu0 0.0
        %665 = vmatprep.subr.mxu0 0.0
        %666 = vmatpush1.msra.mxu0 0.0
        %667 = vmatprep.subr.mxu0 0.0
        %668 = vmatpush1.msra.mxu0 0.0
        %669 = vmatprep.subr.mxu0 0.0
        %670 = vmatpush1.msra.mxu0 0.0
        %671 = vmatprep.subr.mxu0 0.0
        %672 = vmatpush1.msra.mxu0 0.0
        %673 = vmatprep.subr.mxu0 0.0
        %674 = vmatpush1.msra.mxu0 0.0
        %675 = vmatprep.subr.mxu0 0.0
        %676 = vmatpush1.msra.mxu0 0.0
        %677 = vmatprep.subr.mxu0 0.0
        %678 = vmatpush1.msra.mxu0 0.0
        %679 = vmatprep.subr.mxu0 0.0
        %680 = vmatpush1.msra.mxu0 0.0
        %681 = vmatprep.subr.mxu0 0.0
        %682 = vmatpush1.msra.mxu0 0.0
        %683 = vmatprep.subr.mxu0 0.0
        %684 = vmatpush1.msra.mxu0 0.0
        %685 = vmatprep.subr.mxu0 0.0
        %686 = vmatpush1.msra.mxu0 0.0
        %687 = vmatprep.subr.mxu0 0.0
        %688 = vmatpush1.msra.mxu0 0.0
        %689 = vmatprep.subr.mxu0 0.0
        %690 = vmatpush1.msra.mxu0 0.0
        %691 = vmatprep.subr.mxu0 0.0
        %692 = vmatpush1.msra.mxu0 0.0
        %693 = vmatprep.subr.mxu0 0.0
        %694 = vmatpush1.msra.mxu0 0.0
        %695 = vmatprep.subr.mxu0 0.0
        %696 = vmatpush1.msra.mxu0 0.0
        %697 = vmatprep.subr.mxu0 0.0
        %698 = vmatpush1.msra.mxu0 0.0
        %699 = vmatprep.subr.mxu0 0.0
        %700 = vmatpush1.msra.mxu0 0.0
        %701 = vmatprep.mubr.f32.mxu0 0.0
        %702 = vmatmul.mubr.f32.gmra.mrb[0].mxu0 %v626
        %v703 = vpop.f32.mrb[0].mxu0
        %v704 = vadd.f32 0.0, %v703
        %v705 = vpop.f32.mrb[0].mxu0
        %706 = vmatprep.mubr.f32.mxu0 0.0
        %707 = vmatmul.mubr.f32.gmra.mrb[0].mxu0 %v629
        %v708 = vpop.f32.mrb[0].mxu0
        %v709 = vadd.f32 0.0, %v708
        %v710 = vpop.f32.mrb[0].mxu0
        %711 = vmatprep.mubr.f32.mxu0 0.0
        %712 = vmatmul.mubr.f32.gmra.mrb[0].mxu0 %v632
        %v713 = vpop.f32.mrb[0].mxu0
        %v714 = vadd.f32 0.0, %v713
        %v715 = vpop.f32.mrb[0].mxu0
        %716 = vmatprep.mubr.f32.mxu0 0.0
        %717 = vmatmul.mubr.f32.gmra.mrb[0].mxu0 %v635
        %v718 = vpop.f32.mrb[0].mxu0
        %v719 = vadd.f32 0.0, %v718
        %v720 = vpop.f32.mrb[0].mxu0
        %721 = vdwg.mxu0
        %726 = vrot.lane.b32.xlu0 %v704, 4
        %v727 = vpop.permute.xlu0 %726
        %728 = vrot.lane.b32.xlu0 %v709, 4
        %v729 = vpop.permute.xlu0 %728
        %730 = vrot.lane.b32.xlu0 %v714, 4
        %v731 = vpop.permute.xlu0 %730
        %732 = vrot.lane.b32.xlu0 %v719, 4
        %v733 = vpop.permute.xlu0 %732
        %vm738 = vcmask 293920
        %739 = vst.msk [vmem:[#allocation2 + $0x4] sm:$0xff] %vm738, %v727
        %740 = vst.msk [vmem:[#allocation2 + $0xc] sm:$0xff] %vm738, %v729
        %741 = vst.msk [vmem:[#allocation2 + $0x14] sm:$0xff] %vm738, %v731
        %742 = vst.msk [vmem:[#allocation2 + $0x1c] sm:$0xff] %vm738, %v733
        %s743 = scalar_lea.vmem %s298, 16 [#allocation4]
        %v744 = vld [vmem:[%s743] sm:$0xff]
        %v745 = vld [vmem:[%s743 + $0x8] sm:$0xff]
        %v746 = vld [vmem:[#allocation7] sm:$0xff]
        %v747 = vld [vmem:[#allocation7 + $0x8] sm:$0xff]
        %v749 = vsel %vm539, %v744, 0
        %v752 = vsel %vm539, %v745, 0
        %754 = vmatprep.subr.mxu0 0.0
        %755 = vmatpush1.msra.mxu0 %v746
        %756 = vmatprep.subr.mxu0 0.0
        %757 = vmatpush1.msra.mxu0 %v747
        %758 = vmatprep.subr.mxu0 0.0
        %759 = vmatpush1.msra.mxu0 0.0
        %760 = vmatprep.subr.mxu0 0.0
        %761 = vmatpush1.msra.mxu0 0.0
        %762 = vmatprep.subr.mxu0 0.0
        %763 = vmatpush1.msra.mxu0 0.0
        %764 = vmatprep.subr.mxu0 0.0
        %765 = vmatpush1.msra.mxu0 0.0
        %766 = vmatprep.subr.mxu0 0.0
        %767 = vmatpush1.msra.mxu0 0.0
        %768 = vmatprep.subr.mxu0 0.0
        %769 = vmatpush1.msra.mxu0 0.0
        %770 = vmatprep.subr.mxu0 0.0
        %771 = vmatpush1.msra.mxu0 0.0
        %772 = vmatprep.subr.mxu0 0.0
        %773 = vmatpush1.msra.mxu0 0.0
        %774 = vmatprep.subr.mxu0 0.0
        %775 = vmatpush1.msra.mxu0 0.0
        %776 = vmatprep.subr.mxu0 0.0
        %777 = vmatpush1.msra.mxu0 0.0
        %778 = vmatprep.subr.mxu0 0.0
        %779 = vmatpush1.msra.mxu0 0.0
        %780 = vmatprep.subr.mxu0 0.0
        %781 = vmatpush1.msra.mxu0 0.0
        %782 = vmatprep.subr.mxu0 0.0
        %783 = vmatpush1.msra.mxu0 0.0
        %784 = vmatprep.subr.mxu0 0.0
        %785 = vmatpush1.msra.mxu0 0.0
        %786 = vmatprep.subr.mxu0 0.0
        %787 = vmatpush1.msra.mxu0 0.0
        %788 = vmatprep.subr.mxu0 0.0
        %789 = vmatpush1.msra.mxu0 0.0
        %790 = vmatprep.subr.mxu0 0.0
        %791 = vmatpush1.msra.mxu0 0.0
        %792 = vmatprep.subr.mxu0 0.0
        %793 = vmatpush1.msra.mxu0 0.0
        %794 = vmatprep.subr.mxu0 0.0
        %795 = vmatpush1.msra.mxu0 0.0
        %796 = vmatprep.subr.mxu0 0.0
        %797 = vmatpush1.msra.mxu0 0.0
        %798 = vmatprep.subr.mxu0 0.0
        %799 = vmatpush1.msra.mxu0 0.0
        %800 = vmatprep.subr.mxu0 0.0
        %801 = vmatpush1.msra.mxu0 0.0
        %802 = vmatprep.subr.mxu0 0.0
        %803 = vmatpush1.msra.mxu0 0.0
        %804 = vmatprep.subr.mxu0 0.0
        %805 = vmatpush1.msra.mxu0 0.0
        %806 = vmatprep.subr.mxu0 0.0
        %807 = vmatpush1.msra.mxu0 0.0
        %808 = vmatprep.subr.mxu0 0.0
        %809 = vmatpush1.msra.mxu0 0.0
        %810 = vmatprep.subr.mxu0 0.0
        %811 = vmatpush1.msra.mxu0 0.0
        %812 = vmatprep.subr.mxu0 0.0
        %813 = vmatpush1.msra.mxu0 0.0
        %814 = vmatprep.subr.mxu0 0.0
        %815 = vmatpush1.msra.mxu0 0.0
        %816 = vmatprep.subr.mxu0 0.0
        %817 = vmatpush1.msra.mxu0 0.0
        %818 = vmatprep.mubr.f32.mxu0 0.0
        %819 = vmatmul.mubr.f32.gmra.mrb[0].mxu0 %v749
        %v820 = vpop.f32.mrb[0].mxu0
        %v821 = vadd.f32 0.0, %v820
        %v822 = vpop.f32.mrb[0].mxu0
        %823 = vmatprep.mubr.f32.mxu0 0.0
        %824 = vmatmul.mubr.f32.gmra.mrb[0].mxu0 %v752
        %v825 = vpop.f32.mrb[0].mxu0
        %v826 = vadd.f32 0.0, %v825
        %v827 = vpop.f32.mrb[0].mxu0
        %828 = vdwg.mxu0
        %v829 = vld [vmem:[%s1] sm:$0xff]
        %v830 = vld [vmem:[%s1 + $0x8] sm:$0xff]
        %v831 = vld [vmem:[%s1 + $0x10] sm:$0xff]
        %v832 = vld [vmem:[%s1 + $0x18] sm:$0xff]
        %v834 = vsel %vm539, %v829, 0
        %v837 = vsel %vm539, %v830, 0
        %v840 = vsel %vm539, %v831, 0
        %v843 = vsel %vm539, %v832, 0
        %845 = vmatprep.subr.mxu0 0.0
        %846 = vmatpush1.msra.mxu0 %v821
        %847 = vmatprep.subr.mxu0 0.0
        %848 = vmatpush1.msra.mxu0 %v826
        %849 = vmatprep.subr.mxu0 0.0
        %850 = vmatpush1.msra.mxu0 0.0
        %851 = vmatprep.subr.mxu0 0.0
        %852 = vmatpush1.msra.mxu0 0.0
        %853 = vmatprep.subr.mxu0 0.0
        %854 = vmatpush1.msra.mxu0 0.0
        %855 = vmatprep.subr.mxu0 0.0
        %856 = vmatpush1.msra.mxu0 0.0
        %857 = vmatprep.subr.mxu0 0.0
        %858 = vmatpush1.msra.mxu0 0.0
        %859 = vmatprep.subr.mxu0 0.0
        %860 = vmatpush1.msra.mxu0 0.0
        %861 = vmatprep.subr.mxu0 0.0
        %862 = vmatpush1.msra.mxu0 0.0
        %863 = vmatprep.subr.mxu0 0.0
        %864 = vmatpush1.msra.mxu0 0.0
        %865 = vmatprep.subr.mxu0 0.0
        %866 = vmatpush1.msra.mxu0 0.0
        %867 = vmatprep.subr.mxu0 0.0
        %868 = vmatpush1.msra.mxu0 0.0
        %869 = vmatprep.subr.mxu0 0.0
        %870 = vmatpush1.msra.mxu0 0.0
        %871 = vmatprep.subr.mxu0 0.0
        %872 = vmatpush1.msra.mxu0 0.0
        %873 = vmatprep.subr.mxu0 0.0
        %874 = vmatpush1.msra.mxu0 0.0
        %875 = vmatprep.subr.mxu0 0.0
        %876 = vmatpush1.msra.mxu0 0.0
        %877 = vmatprep.subr.mxu0 0.0
        %878 = vmatpush1.msra.mxu0 0.0
        %879 = vmatprep.subr.mxu0 0.0
        %880 = vmatpush1.msra.mxu0 0.0
        %881 = vmatprep.subr.mxu0 0.0
        %882 = vmatpush1.msra.mxu0 0.0
        %883 = vmatprep.subr.mxu0 0.0
        %884 = vmatpush1.msra.mxu0 0.0
        %885 = vmatprep.subr.mxu0 0.0
        %886 = vmatpush1.msra.mxu0 0.0
        %887 = vmatprep.subr.mxu0 0.0
        %888 = vmatpush1.msra.mxu0 0.0
        %889 = vmatprep.subr.mxu0 0.0
        %890 = vmatpush1.msra.mxu0 0.0
        %891 = vmatprep.subr.mxu0 0.0
        %892 = vmatpush1.msra.mxu0 0.0
        %893 = vmatprep.subr.mxu0 0.0
        %894 = vmatpush1.msra.mxu0 0.0
        %895 = vmatprep.subr.mxu0 0.0
        %896 = vmatpush1.msra.mxu0 0.0
        %897 = vmatprep.subr.mxu0 0.0
        %898 = vmatpush1.msra.mxu0 0.0
        %899 = vmatprep.subr.mxu0 0.0
        %900 = vmatpush1.msra.mxu0 0.0
        %901 = vmatprep.subr.mxu0 0.0
        %902 = vmatpush1.msra.mxu0 0.0
        %903 = vmatprep.subr.mxu0 0.0
        %904 = vmatpush1.msra.mxu0 0.0
        %905 = vmatprep.subr.mxu0 0.0
        %906 = vmatpush1.msra.mxu0 0.0
        %907 = vmatprep.subr.mxu0 0.0
        %908 = vmatpush1.msra.mxu0 0.0
        %909 = vmatprep.mubr.f32.mxu0 0.0
        %910 = vmatmul.mubr.f32.gmra.mrb[0].mxu0 %v834
        %v911 = vpop.f32.mrb[0].mxu0
        %v912 = vadd.f32 0.0, %v911
        %v913 = vpop.f32.mrb[0].mxu0
        %914 = vmatprep.mubr.f32.mxu0 0.0
        %915 = vmatmul.mubr.f32.gmra.mrb[0].mxu0 %v837
        %v916 = vpop.f32.mrb[0].mxu0
        %v917 = vadd.f32 0.0, %v916
        %v918 = vpop.f32.mrb[0].mxu0
        %919 = vmatprep.mubr.f32.mxu0 0.0
        %920 = vmatmul.mubr.f32.gmra.mrb[0].mxu0 %v840
        %v921 = vpop.f32.mrb[0].mxu0
        %v922 = vadd.f32 0.0, %v921
        %v923 = vpop.f32.mrb[0].mxu0
        %924 = vmatprep.mubr.f32.mxu0 0.0
        %925 = vmatmul.mubr.f32.gmra.mrb[0].mxu0 %v843
        %v926 = vpop.f32.mrb[0].mxu0
        %v927 = vadd.f32 0.0, %v926
        %v928 = vpop.f32.mrb[0].mxu0
        %929 = vdwg.mxu0
        %934 = vrot.lane.b32.xlu0 %v912, 4
        %v935 = vpop.permute.xlu0 %934
        %936 = vrot.lane.b32.xlu0 %v917, 4
        %v937 = vpop.permute.xlu0 %936
        %938 = vrot.lane.b32.xlu0 %v922, 4
        %v939 = vpop.permute.xlu0 %938
        %940 = vrot.lane.b32.xlu0 %v927, 4
        %v941 = vpop.permute.xlu0 %940
        %s946 = scalar_lea.vmem [#allocation2], 40
        %947 = vst.msk [vmem:[%s946 + $0x4] sm:$0xff] %vm738, %v935
        %948 = vst.msk [vmem:[%s946 + $0xc] sm:$0xff] %vm738, %v937
        %949 = vst.msk [vmem:[%s946 + $0x14] sm:$0xff] %vm738, %v939
        %950 = vst.msk [vmem:[%s946 + $0x1c] sm:$0xff] %vm738, %v941
        %s951 = scalar_lea.vmem %s298, 32 [#allocation4]
        %v952 = vld [vmem:[%s951] sm:$0xff]
        %v953 = vld [vmem:[%s951 + $0x8] sm:$0xff]
        %v954 = vld [vmem:[#allocation7] sm:$0xff]
        %v955 = vld [vmem:[#allocation7 + $0x8] sm:$0xff]
        %v957 = vsel %vm539, %v952, 0
        %v960 = vsel %vm539, %v953, 0
        %962 = vmatprep.subr.mxu0 0.0
        %963 = vmatpush1.msra.mxu0 %v954
        %964 = vmatprep.subr.mxu0 0.0
        %965 = vmatpush1.msra.mxu0 %v955
        %966 = vmatprep.subr.mxu0 0.0
        %967 = vmatpush1.msra.mxu0 0.0
        %968 = vmatprep.subr.mxu0 0.0
        %969 = vmatpush1.msra.mxu0 0.0
        %970 = vmatprep.subr.mxu0 0.0
        %971 = vmatpush1.msra.mxu0 0.0
        %972 = vmatprep.subr.mxu0 0.0
        %973 = vmatpush1.msra.mxu0 0.0
        %974 = vmatprep.subr.mxu0 0.0
        %975 = vmatpush1.msra.mxu0 0.0
        %976 = vmatprep.subr.mxu0 0.0
        %977 = vmatpush1.msra.mxu0 0.0
        %978 = vmatprep.subr.mxu0 0.0
        %979 = vmatpush1.msra.mxu0 0.0
        %980 = vmatprep.subr.mxu0 0.0
        %981 = vmatpush1.msra.mxu0 0.0
        %982 = vmatprep.subr.mxu0 0.0
        %983 = vmatpush1.msra.mxu0 0.0
        %984 = vmatprep.subr.mxu0 0.0
        %985 = vmatpush1.msra.mxu0 0.0
        %986 = vmatprep.subr.mxu0 0.0
        %987 = vmatpush1.msra.mxu0 0.0
        %988 = vmatprep.subr.mxu0 0.0
        %989 = vmatpush1.msra.mxu0 0.0
        %990 = vmatprep.subr.mxu0 0.0
        %991 = vmatpush1.msra.mxu0 0.0
        %992 = vmatprep.subr.mxu0 0.0
        %993 = vmatpush1.msra.mxu0 0.0
        %994 = vmatprep.subr.mxu0 0.0
        %995 = vmatpush1.msra.mxu0 0.0
        %996 = vmatprep.subr.mxu0 0.0
        %997 = vmatpush1.msra.mxu0 0.0
        %998 = vmatprep.subr.mxu0 0.0
        %999 = vmatpush1.msra.mxu0 0.0
        %1000 = vmatprep.subr.mxu0 0.0
        %1001 = vmatpush1.msra.mxu0 0.0
        %1002 = vmatprep.subr.mxu0 0.0
        %1003 = vmatpush1.msra.mxu0 0.0
        %1004 = vmatprep.subr.mxu0 0.0
        %1005 = vmatpush1.msra.mxu0 0.0
        %1006 = vmatprep.subr.mxu0 0.0
        %1007 = vmatpush1.msra.mxu0 0.0
        %1008 = vmatprep.subr.mxu0 0.0
        %1009 = vmatpush1.msra.mxu0 0.0
        %1010 = vmatprep.subr.mxu0 0.0
        %1011 = vmatpush1.msra.mxu0 0.0
        %1012 = vmatprep.subr.mxu0 0.0
        %1013 = vmatpush1.msra.mxu0 0.0
        %1014 = vmatprep.subr.mxu0 0.0
        %1015 = vmatpush1.msra.mxu0 0.0
        %1016 = vmatprep.subr.mxu0 0.0
        %1017 = vmatpush1.msra.mxu0 0.0
        %1018 = vmatprep.subr.mxu0 0.0
        %1019 = vmatpush1.msra.mxu0 0.0
        %1020 = vmatprep.subr.mxu0 0.0
        %1021 = vmatpush1.msra.mxu0 0.0
        %1022 = vmatprep.subr.mxu0 0.0
        %1023 = vmatpush1.msra.mxu0 0.0
        %1024 = vmatprep.subr.mxu0 0.0
        %1025 = vmatpush1.msra.mxu0 0.0
        %1026 = vmatprep.mubr.f32.mxu0 0.0
        %1027 = vmatmul.mubr.f32.gmra.mrb[0].mxu0 %v957
        %v1028 = vpop.f32.mrb[0].mxu0
        %v1029 = vadd.f32 0.0, %v1028
        %v1030 = vpop.f32.mrb[0].mxu0
        %1031 = vmatprep.mubr.f32.mxu0 0.0
        %1032 = vmatmul.mubr.f32.gmra.mrb[0].mxu0 %v960
        %v1033 = vpop.f32.mrb[0].mxu0
        %v1034 = vadd.f32 0.0, %v1033
        %v1035 = vpop.f32.mrb[0].mxu0
        %1036 = vdwg.mxu0
        %v1037 = vld [vmem:[%s1] sm:$0xff]
        %v1038 = vld [vmem:[%s1 + $0x8] sm:$0xff]
        %v1039 = vld [vmem:[%s1 + $0x10] sm:$0xff]
        %v1040 = vld [vmem:[%s1 + $0x18] sm:$0xff]
        %v1042 = vsel %vm539, %v1037, 0
        %v1045 = vsel %vm539, %v1038, 0
        %v1048 = vsel %vm539, %v1039, 0
        %v1051 = vsel %vm539, %v1040, 0
        %1053 = vmatprep.subr.mxu0 0.0
        %1054 = vmatpush1.msra.mxu0 %v1029
        %1055 = vmatprep.subr.mxu0 0.0
        %1056 = vmatpush1.msra.mxu0 %v1034
        %1057 = vmatprep.subr.mxu0 0.0
        %1058 = vmatpush1.msra.mxu0 0.0
        %1059 = vmatprep.subr.mxu0 0.0
        %1060 = vmatpush1.msra.mxu0 0.0
        %1061 = vmatprep.subr.mxu0 0.0
        %1062 = vmatpush1.msra.mxu0 0.0
        %1063 = vmatprep.subr.mxu0 0.0
        %1064 = vmatpush1.msra.mxu0 0.0
        %1065 = vmatprep.subr.mxu0 0.0
        %1066 = vmatpush1.msra.mxu0 0.0
        %1067 = vmatprep.subr.mxu0 0.0
        %1068 = vmatpush1.msra.mxu0 0.0
        %1069 = vmatprep.subr.mxu0 0.0
        %1070 = vmatpush1.msra.mxu0 0.0
        %1071 = vmatprep.subr.mxu0 0.0
        %1072 = vmatpush1.msra.mxu0 0.0
        %1073 = vmatprep.subr.mxu0 0.0
        %1074 = vmatpush1.msra.mxu0 0.0
        %1075 = vmatprep.subr.mxu0 0.0
        %1076 = vmatpush1.msra.mxu0 0.0
        %1077 = vmatprep.subr.mxu0 0.0
        %1078 = vmatpush1.msra.mxu0 0.0
        %1079 = vmatprep.subr.mxu0 0.0
        %1080 = vmatpush1.msra.mxu0 0.0
        %1081 = vmatprep.subr.mxu0 0.0
        %1082 = vmatpush1.msra.mxu0 0.0
        %1083 = vmatprep.subr.mxu0 0.0
        %1084 = vmatpush1.msra.mxu0 0.0
        %1085 = vmatprep.subr.mxu0 0.0
        %1086 = vmatpush1.msra.mxu0 0.0
        %1087 = vmatprep.subr.mxu0 0.0
        %1088 = vmatpush1.msra.mxu0 0.0
        %1089 = vmatprep.subr.mxu0 0.0
        %1090 = vmatpush1.msra.mxu0 0.0
        %1091 = vmatprep.subr.mxu0 0.0
        %1092 = vmatpush1.msra.mxu0 0.0
        %1093 = vmatprep.subr.mxu0 0.0
        %1094 = vmatpush1.msra.mxu0 0.0
        %1095 = vmatprep.subr.mxu0 0.0
        %1096 = vmatpush1.msra.mxu0 0.0
        %1097 = vmatprep.subr.mxu0 0.0
        %1098 = vmatpush1.msra.mxu0 0.0
        %1099 = vmatprep.subr.mxu0 0.0
        %1100 = vmatpush1.msra.mxu0 0.0
        %1101 = vmatprep.subr.mxu0 0.0
        %1102 = vmatpush1.msra.mxu0 0.0
        %1103 = vmatprep.subr.mxu0 0.0
        %1104 = vmatpush1.msra.mxu0 0.0
        %1105 = vmatprep.subr.mxu0 0.0
        %1106 = vmatpush1.msra.mxu0 0.0
        %1107 = vmatprep.subr.mxu0 0.0
        %1108 = vmatpush1.msra.mxu0 0.0
        %1109 = vmatprep.subr.mxu0 0.0
        %1110 = vmatpush1.msra.mxu0 0.0
        %1111 = vmatprep.subr.mxu0 0.0
        %1112 = vmatpush1.msra.mxu0 0.0
        %1113 = vmatprep.subr.mxu0 0.0
        %1114 = vmatpush1.msra.mxu0 0.0
        %1115 = vmatprep.subr.mxu0 0.0
        %1116 = vmatpush1.msra.mxu0 0.0
        %1117 = vmatprep.mubr.f32.mxu0 0.0
        %1118 = vmatmul.mubr.f32.gmra.mrb[0].mxu0 %v1042
        %v1119 = vpop.f32.mrb[0].mxu0
        %v1120 = vadd.f32 0.0, %v1119
        %v1121 = vpop.f32.mrb[0].mxu0
        %1122 = vmatprep.mubr.f32.mxu0 0.0
        %1123 = vmatmul.mubr.f32.gmra.mrb[0].mxu0 %v1045
        %v1124 = vpop.f32.mrb[0].mxu0
        %v1125 = vadd.f32 0.0, %v1124
        %v1126 = vpop.f32.mrb[0].mxu0
        %1127 = vmatprep.mubr.f32.mxu0 0.0
        %1128 = vmatmul.mubr.f32.gmra.mrb[0].mxu0 %v1048
        %v1129 = vpop.f32.mrb[0].mxu0
        %v1130 = vadd.f32 0.0, %v1129
        %v1131 = vpop.f32.mrb[0].mxu0
        %1132 = vmatprep.mubr.f32.mxu0 0.0
        %1133 = vmatmul.mubr.f32.gmra.mrb[0].mxu0 %v1051
        %v1134 = vpop.f32.mrb[0].mxu0
        %v1135 = vadd.f32 0.0, %v1134
        %v1136 = vpop.f32.mrb[0].mxu0
        %1137 = vdwg.mxu0
        %1142 = vrot.lane.b32.xlu0 %v1120, 4
        %v1143 = vpop.permute.xlu0 %1142
        %1144 = vrot.lane.b32.xlu0 %v1125, 4
        %v1145 = vpop.permute.xlu0 %1144
        %1146 = vrot.lane.b32.xlu0 %v1130, 4
        %v1147 = vpop.permute.xlu0 %1146
        %1148 = vrot.lane.b32.xlu0 %v1135, 4
        %v1149 = vpop.permute.xlu0 %1148
        %s1154 = scalar_lea.vmem [#allocation2], 80
        %1155 = vst.msk [vmem:[%s1154 + $0x4] sm:$0xff] %vm738, %v1143
        %1156 = vst.msk [vmem:[%s1154 + $0xc] sm:$0xff] %vm738, %v1145
        %1157 = vst.msk [vmem:[%s1154 + $0x14] sm:$0xff] %vm738, %v1147
        %1158 = vst.msk [vmem:[%s1154 + $0x1c] sm:$0xff] %vm738, %v1149
        loop: start=0, step=1, limit=32
        $region65: #{tpu_custom_call.1} parent=47 // loop_pre_header
          _
        $region66: #{tpu_custom_call.1} parent=47 // loop_header
          %s1160 = sphi 0, %s1164
          %p1161 = scmp.ge.s32.totalorder %s1160, 32
        $region67: #{tpu_custom_call.1} parent=47 // loop_header_branch
          %1163 = sbr.rel (%p1161) target = $region71
        $region68: #{tpu_custom_call.1} parent=47 // loop_body
          %s1165 = scalar_lea.vmem [#allocation2], %s1160
          %v1166 = vld [vmem:[%s1165] sm:$0xff]
          %v1167 = vld [vmem:[%s1165 + $0x8] sm:$0x1]
          %1168 = vst.msk [vmem:[#allocation3] sm:$0xff] %vm357, %v1166
          %vm1169 = vcmask 253952
          %1170 = vst.msk [vmem:[#allocation3 + $0x8] sm:$0x1] %vm1169, %v1167
          %v1171 = vld [vmem:[%s1165] sm:$0xff]
          %v1172 = vld [vmem:[%s1165 + $0x8] sm:$0x1]
          %1175 = vrot.lane.b32.xlu0 %v1171, 127
          %v1176 = vpop.permute.xlu0 %1175
          %1177 = vrot.lane.b32.xlu0 %v1172, 127
          %v1178 = vpop.permute.xlu0 %1177
          %1181 = vst.msk [vmem:[#allocation3 + $0x9] sm:$0xff] %vm357, %v1176
          %1182 = vst.msk [vmem:[#allocation3 + $0x11] sm:$0x1] %vm1169, %v1178
          %v1183 = vld [vmem:[%s1165] sm:$0xff]
          %v1184 = vld [vmem:[%s1165 + $0x8] sm:$0x1]
          %1187 = vrot.lane.b32.xlu0 %v1183, 126
          %v1188 = vpop.permute.xlu0 %1187
          %1189 = vrot.lane.b32.xlu0 %v1184, 126
          %v1190 = vpop.permute.xlu0 %1189
          %1193 = vst.msk [vmem:[#allocation3 + $0x12] sm:$0xff] %vm357, %v1188
          %1194 = vst.msk [vmem:[#allocation3 + $0x1a] sm:$0x1] %vm1169, %v1190
          %v1195 = vld [vmem:[%s1165] sm:$0xff]
          %v1196 = vld [vmem:[%s1165 + $0x8] sm:$0x1]
          %1199 = vrot.lane.b32.xlu0 %v1195, 125
          %v1200 = vpop.permute.xlu0 %1199
          %1201 = vrot.lane.b32.xlu0 %v1196, 125
          %v1202 = vpop.permute.xlu0 %1201
          %1205 = vst.msk [vmem:[#allocation3 + $0x1b] sm:$0xff] %vm357, %v1200
          %1206 = vst.msk [vmem:[#allocation3 + $0x23] sm:$0x1] %vm1169, %v1202
          %v1207 = vld [vmem:[%s1165] sm:$0xff]
          %v1208 = vld [vmem:[%s1165 + $0x8] sm:$0x1]
          %1211 = vrot.lane.b32.xlu0 %v1207, 124
          %v1212 = vpop.permute.xlu0 %1211
          %1213 = vrot.lane.b32.xlu0 %v1208, 124
          %v1214 = vpop.permute.xlu0 %1213
          %1217 = vst.msk [vmem:[#allocation3 + $0x24] sm:$0xff] %vm357, %v1212
          %1218 = vst.msk [vmem:[#allocation3 + $0x2c] sm:$0x1] %vm1169, %v1214
          %v1219 = vld [vmem:[%s1165] sm:$0xff]
          %v1220 = vld [vmem:[%s1165 + $0x8] sm:$0x1]
          %1223 = vrot.lane.b32.xlu0 %v1219, 123
          %v1224 = vpop.permute.xlu0 %1223
          %1225 = vrot.lane.b32.xlu0 %v1220, 123
          %v1226 = vpop.permute.xlu0 %1225
          %1229 = vst.msk [vmem:[#allocation3 + $0x2d] sm:$0xff] %vm357, %v1224
          %1230 = vst.msk [vmem:[#allocation3 + $0x35] sm:$0x1] %vm1169, %v1226
          %v1231 = vld [vmem:[%s1165] sm:$0xff]
          %v1232 = vld [vmem:[%s1165 + $0x8] sm:$0x1]
          %1235 = vrot.lane.b32.xlu0 %v1231, 122
          %v1236 = vpop.permute.xlu0 %1235
          %1237 = vrot.lane.b32.xlu0 %v1232, 122
          %v1238 = vpop.permute.xlu0 %1237
          %1241 = vst.msk [vmem:[#allocation3 + $0x36] sm:$0xff] %vm357, %v1236
          %1242 = vst.msk [vmem:[#allocation3 + $0x3e] sm:$0x1] %vm1169, %v1238
          %v1243 = vld [vmem:[%s1165] sm:$0xff]
          %v1244 = vld [vmem:[%s1165 + $0x8] sm:$0x1]
          %1247 = vrot.lane.b32.xlu0 %v1243, 121
          %v1248 = vpop.permute.xlu0 %1247
          %1249 = vrot.lane.b32.xlu0 %v1244, 121
          %v1250 = vpop.permute.xlu0 %1249
          %1253 = vst.msk [vmem:[#allocation3 + $0x3f] sm:$0xff] %vm357, %v1248
          %1254 = vst.msk [vmem:[#allocation3 + $0x47] sm:$0x1] %vm1169, %v1250
          %v1255 = vld [vmem:[%s1165] sm:$0xff]
          %v1256 = vld [vmem:[%s1165 + $0x8] sm:$0x1]
          %1259 = vrot.lane.b32.xlu0 %v1255, 120
          %v1260 = vpop.permute.xlu0 %1259
          %1261 = vrot.lane.b32.xlu0 %v1256, 120
          %v1262 = vpop.permute.xlu0 %1261
          %1265 = vst.msk [vmem:[#allocation3 + $0x48] sm:$0xff] %vm357, %v1260
          %1266 = vst.msk [vmem:[#allocation3 + $0x50] sm:$0x1] %vm1169, %v1262
          %s1267 = sadd.s32 %s1160, 40
          %s1268 = scalar_lea.vmem [#allocation2], %s1267
          %v1269 = vld [vmem:[%s1268] sm:$0xff]
          %v1270 = vld [vmem:[%s1268 + $0x8] sm:$0x1]
          %1271 = vst.msk [vmem:[#allocation3 + $0x51] sm:$0xff] %vm357, %v1269
          %1272 = vst.msk [vmem:[#allocation3 + $0x59] sm:$0x1] %vm1169, %v1270
          %v1273 = vld [vmem:[%s1268] sm:$0xff]
          %v1274 = vld [vmem:[%s1268 + $0x8] sm:$0x1]
          %1277 = vrot.lane.b32.xlu0 %v1273, 127
          %v1278 = vpop.permute.xlu0 %1277
          %1279 = vrot.lane.b32.xlu0 %v1274, 127
          %v1280 = vpop.permute.xlu0 %1279
          %1283 = vst.msk [vmem:[#allocation3 + $0x5a] sm:$0xff] %vm357, %v1278
          %1284 = vst.msk [vmem:[#allocation3 + $0x62] sm:$0x1] %vm1169, %v1280
          %v1285 = vld [vmem:[%s1268] sm:$0xff]
          %v1286 = vld [vmem:[%s1268 + $0x8] sm:$0x1]
          %1289 = vrot.lane.b32.xlu0 %v1285, 126
          %v1290 = vpop.permute.xlu0 %1289
          %1291 = vrot.lane.b32.xlu0 %v1286, 126
          %v1292 = vpop.permute.xlu0 %1291
          %1295 = vst.msk [vmem:[#allocation3 + $0x63] sm:$0xff] %vm357, %v1290
          %1296 = vst.msk [vmem:[#allocation3 + $0x6b] sm:$0x1] %vm1169, %v1292
          %v1297 = vld [vmem:[%s1268] sm:$0xff]
          %v1298 = vld [vmem:[%s1268 + $0x8] sm:$0x1]
          %1301 = vrot.lane.b32.xlu0 %v1297, 125
          %v1302 = vpop.permute.xlu0 %1301
          %1303 = vrot.lane.b32.xlu0 %v1298, 125
          %v1304 = vpop.permute.xlu0 %1303
          %1307 = vst.msk [vmem:[#allocation3 + $0x6c] sm:$0xff] %vm357, %v1302
          %1308 = vst.msk [vmem:[#allocation3 + $0x74] sm:$0x1] %vm1169, %v1304
          %v1309 = vld [vmem:[%s1268] sm:$0xff]
          %v1310 = vld [vmem:[%s1268 + $0x8] sm:$0x1]
          %1313 = vrot.lane.b32.xlu0 %v1309, 124
          %v1314 = vpop.permute.xlu0 %1313
          %1315 = vrot.lane.b32.xlu0 %v1310, 124
          %v1316 = vpop.permute.xlu0 %1315
          %1319 = vst.msk [vmem:[#allocation3 + $0x75] sm:$0xff] %vm357, %v1314
          %1320 = vst.msk [vmem:[#allocation3 + $0x7d] sm:$0x1] %vm1169, %v1316
          %v1321 = vld [vmem:[%s1268] sm:$0xff]
          %v1322 = vld [vmem:[%s1268 + $0x8] sm:$0x1]
          %1325 = vrot.lane.b32.xlu0 %v1321, 123
          %v1326 = vpop.permute.xlu0 %1325
          %1327 = vrot.lane.b32.xlu0 %v1322, 123
          %v1328 = vpop.permute.xlu0 %1327
          %1331 = vst.msk [vmem:[#allocation3 + $0x7e] sm:$0xff] %vm357, %v1326
          %1332 = vst.msk [vmem:[#allocation3 + $0x86] sm:$0x1] %vm1169, %v1328
          %v1333 = vld [vmem:[%s1268] sm:$0xff]
          %v1334 = vld [vmem:[%s1268 + $0x8] sm:$0x1]
          %1337 = vrot.lane.b32.xlu0 %v1333, 122
          %v1338 = vpop.permute.xlu0 %1337
          %1339 = vrot.lane.b32.xlu0 %v1334, 122
          %v1340 = vpop.permute.xlu0 %1339
          %1343 = vst.msk [vmem:[#allocation3 + $0x87] sm:$0xff] %vm357, %v1338
          %1344 = vst.msk [vmem:[#allocation3 + $0x8f] sm:$0x1] %vm1169, %v1340
          %v1345 = vld [vmem:[%s1268] sm:$0xff]
          %v1346 = vld [vmem:[%s1268 + $0x8] sm:$0x1]
          %1349 = vrot.lane.b32.xlu0 %v1345, 121
          %v1350 = vpop.permute.xlu0 %1349
          %1351 = vrot.lane.b32.xlu0 %v1346, 121
          %v1352 = vpop.permute.xlu0 %1351
          %1355 = vst.msk [vmem:[#allocation3 + $0x90] sm:$0xff] %vm357, %v1350
          %1356 = vst.msk [vmem:[#allocation3 + $0x98] sm:$0x1] %vm1169, %v1352
          %v1357 = vld [vmem:[%s1268] sm:$0xff]
          %v1358 = vld [vmem:[%s1268 + $0x8] sm:$0x1]
          %1361 = vrot.lane.b32.xlu0 %v1357, 120
          %v1362 = vpop.permute.xlu0 %1361
          %1363 = vrot.lane.b32.xlu0 %v1358, 120
          %v1364 = vpop.permute.xlu0 %1363
          %1367 = vst.msk [vmem:[#allocation3 + $0x99] sm:$0xff] %vm357, %v1362
          %1368 = vst.msk [vmem:[#allocation3 + $0xa1] sm:$0x1] %vm1169, %v1364
          %s1369 = sadd.s32 %s1160, 80
          %s1370 = scalar_lea.vmem [#allocation2], %s1369
          %v1371 = vld [vmem:[%s1370] sm:$0xff]
          %v1372 = vld [vmem:[%s1370 + $0x8] sm:$0x1]
          %1373 = vst.msk [vmem:[#allocation3 + $0xa2] sm:$0xff] %vm357, %v1371
          %1374 = vst.msk [vmem:[#allocation3 + $0xaa] sm:$0x1] %vm1169, %v1372
          %v1375 = vld [vmem:[%s1370] sm:$0xff]
          %v1376 = vld [vmem:[%s1370 + $0x8] sm:$0x1]
          %1379 = vrot.lane.b32.xlu0 %v1375, 127
          %v1380 = vpop.permute.xlu0 %1379
          %1381 = vrot.lane.b32.xlu0 %v1376, 127
          %v1382 = vpop.permute.xlu0 %1381
          %1385 = vst.msk [vmem:[#allocation3 + $0xab] sm:$0xff] %vm357, %v1380
          %1386 = vst.msk [vmem:[#allocation3 + $0xb3] sm:$0x1] %vm1169, %v1382
          %v1387 = vld [vmem:[%s1370] sm:$0xff]
          %v1388 = vld [vmem:[%s1370 + $0x8] sm:$0x1]
          %1391 = vrot.lane.b32.xlu0 %v1387, 126
          %v1392 = vpop.permute.xlu0 %1391
          %1393 = vrot.lane.b32.xlu0 %v1388, 126
          %v1394 = vpop.permute.xlu0 %1393
          %1397 = vst.msk [vmem:[#allocation3 + $0xb4] sm:$0xff] %vm357, %v1392
          %1398 = vst.msk [vmem:[#allocation3 + $0xbc] sm:$0x1] %vm1169, %v1394
          %v1399 = vld [vmem:[%s1370] sm:$0xff]
          %v1400 = vld [vmem:[%s1370 + $0x8] sm:$0x1]
          %1403 = vrot.lane.b32.xlu0 %v1399, 125
          %v1404 = vpop.permute.xlu0 %1403
          %1405 = vrot.lane.b32.xlu0 %v1400, 125
          %v1406 = vpop.permute.xlu0 %1405
          %1409 = vst.msk [vmem:[#allocation3 + $0xbd] sm:$0xff] %vm357, %v1404
          %1410 = vst.msk [vmem:[#allocation3 + $0xc5] sm:$0x1] %vm1169, %v1406
          %v1411 = vld [vmem:[%s1370] sm:$0xff]
          %v1412 = vld [vmem:[%s1370 + $0x8] sm:$0x1]
          %1415 = vrot.lane.b32.xlu0 %v1411, 124
          %v1416 = vpop.permute.xlu0 %1415
          %1417 = vrot.lane.b32.xlu0 %v1412, 124
          %v1418 = vpop.permute.xlu0 %1417
          %1421 = vst.msk [vmem:[#allocation3 + $0xc6] sm:$0xff] %vm357, %v1416
          %1422 = vst.msk [vmem:[#allocation3 + $0xce] sm:$0x1] %vm1169, %v1418
          %v1423 = vld [vmem:[%s1370] sm:$0xff]
          %v1424 = vld [vmem:[%s1370 + $0x8] sm:$0x1]
          %1427 = vrot.lane.b32.xlu0 %v1423, 123
          %v1428 = vpop.permute.xlu0 %1427
          %1429 = vrot.lane.b32.xlu0 %v1424, 123
          %v1430 = vpop.permute.xlu0 %1429
          %1433 = vst.msk [vmem:[#allocation3 + $0xcf] sm:$0xff] %vm357, %v1428
          %1434 = vst.msk [vmem:[#allocation3 + $0xd7] sm:$0x1] %vm1169, %v1430
          %v1435 = vld [vmem:[%s1370] sm:$0xff]
          %v1436 = vld [vmem:[%s1370 + $0x8] sm:$0x1]
          %1439 = vrot.lane.b32.xlu0 %v1435, 122
          %v1440 = vpop.permute.xlu0 %1439
          %1441 = vrot.lane.b32.xlu0 %v1436, 122
          %v1442 = vpop.permute.xlu0 %1441
          %1445 = vst.msk [vmem:[#allocation3 + $0xd8] sm:$0xff] %vm357, %v1440
          %1446 = vst.msk [vmem:[#allocation3 + $0xe0] sm:$0x1] %vm1169, %v1442
          %v1447 = vld [vmem:[%s1370] sm:$0xff]
          %v1448 = vld [vmem:[%s1370 + $0x8] sm:$0x1]
          %1451 = vrot.lane.b32.xlu0 %v1447, 121
          %v1452 = vpop.permute.xlu0 %1451
          %1453 = vrot.lane.b32.xlu0 %v1448, 121
          %v1454 = vpop.permute.xlu0 %1453
          %1457 = vst.msk [vmem:[#allocation3 + $0xe1] sm:$0xff] %vm357, %v1452
          %1458 = vst.msk [vmem:[#allocation3 + $0xe9] sm:$0x1] %vm1169, %v1454
          %v1459 = vld [vmem:[%s1370] sm:$0xff]
          %v1460 = vld [vmem:[%s1370 + $0x8] sm:$0x1]
          %1463 = vrot.lane.b32.xlu0 %v1459, 120
          %v1464 = vpop.permute.xlu0 %1463
          %1465 = vrot.lane.b32.xlu0 %v1460, 120
          %v1466 = vpop.permute.xlu0 %1465
          %1469 = vst.msk [vmem:[#allocation3 + $0xea] sm:$0xff] %vm357, %v1464
          %1470 = vst.msk [vmem:[#allocation3 + $0xf2] sm:$0x1] %vm1169, %v1466
          %v1471 = vld [vmem:[#allocation9] sm:$0xff]
          %v1472 = vld [vmem:[#allocation9 + $0x8] sm:$0xff]
          %v1473 = vld [vmem:[#allocation9 + $0x10] sm:$0xff]
          %v1474 = vld [vmem:[#allocation9 + $0x18] sm:$0xff]
          %v1475 = vld [vmem:[#allocation9 + $0x20] sm:$0xff]
          %v1476 = vld [vmem:[#allocation9 + $0x28] sm:$0xff]
          %v1477 = vld [vmem:[#allocation9 + $0x30] sm:$0xff]
          %v1478 = vld [vmem:[#allocation9 + $0x38] sm:$0xff]
          %v1479 = vld [vmem:[#allocation9 + $0x40] sm:$0xff]
          %v1480 = vld [vmem:[#allocation9 + $0x48] sm:$0xff]
          %v1481 = vld [vmem:[#allocation9 + $0x50] sm:$0xff]
          %v1482 = vld [vmem:[#allocation9 + $0x58] sm:$0xff]
          %v1483 = vld [vmem:[#allocation9 + $0x60] sm:$0xff]
          %v1484 = vld [vmem:[#allocation9 + $0x68] sm:$0xff]
          %v1485 = vld [vmem:[#allocation9 + $0x70] sm:$0xff]
          %v1486 = vld [vmem:[#allocation9 + $0x78] sm:$0xff]
          %v1487 = vld [vmem:[#allocation3] sm:$0xff]
          %v1488 = vld [vmem:[#allocation3 + $0x8] sm:$0xff]
          %v1489 = vld [vmem:[#allocation3 + $0x10] sm:$0xff]
          %v1490 = vld [vmem:[#allocation3 + $0x18] sm:$0xff]
          %v1491 = vld [vmem:[#allocation3 + $0x20] sm:$0xff]
          %v1492 = vld [vmem:[#allocation3 + $0x28] sm:$0xff]
          %v1493 = vld [vmem:[#allocation3 + $0x30] sm:$0xff]
          %v1494 = vld [vmem:[#allocation3 + $0x38] sm:$0xff]
          %v1495 = vld [vmem:[#allocation3 + $0x40] sm:$0xff]
          %v1496 = vld [vmem:[#allocation3 + $0x48] sm:$0xff]
          %v1497 = vld [vmem:[#allocation3 + $0x50] sm:$0xff]
          %v1498 = vld [vmem:[#allocation3 + $0x58] sm:$0xff]
          %v1499 = vld [vmem:[#allocation3 + $0x60] sm:$0xff]
          %v1500 = vld [vmem:[#allocation3 + $0x68] sm:$0xff]
          %v1501 = vld [vmem:[#allocation3 + $0x70] sm:$0xff]
          %v1502 = vld [vmem:[#allocation3 + $0x78] sm:$0xff]
          %v1503 = vld [vmem:[#allocation3 + $0x80] sm:$0xff]
          %v1504 = vld [vmem:[#allocation3 + $0x88] sm:$0xff]
          %v1505 = vld [vmem:[#allocation3 + $0x90] sm:$0xff]
          %v1506 = vld [vmem:[#allocation3 + $0x98] sm:$0xff]
          %v1507 = vld [vmem:[#allocation3 + $0xa0] sm:$0xff]
          %v1508 = vld [vmem:[#allocation3 + $0xa8] sm:$0xff]
          %v1509 = vld [vmem:[#allocation3 + $0xb0] sm:$0xff]
          %v1510 = vld [vmem:[#allocation3 + $0xb8] sm:$0xff]
          %v1511 = vld [vmem:[#allocation3 + $0xc0] sm:$0xff]
          %v1512 = vld [vmem:[#allocation3 + $0xc8] sm:$0xff]
          %v1513 = vld [vmem:[#allocation3 + $0xd0] sm:$0xff]
          %v1514 = vld [vmem:[#allocation3 + $0xd8] sm:$0xff]
          %v1515 = vld [vmem:[#allocation3 + $0xe0] sm:$0xff]
          %v1516 = vld [vmem:[#allocation3 + $0xe8] sm:$0xff]
          %v1517 = vld [vmem:[#allocation3 + $0xf0] sm:$0xff]
          %v1518 = vld [vmem:[#allocation3 + $0xf8] sm:$0xff]
          %v1519 = vld [vmem:[%s4] sm:$0xff]
          %v1520 = vld [vmem:[%s4 + $0x8] sm:$0xff]
          %v1521 = vld [vmem:[%s4 + $0x10] sm:$0xff]
          %v1522 = vld [vmem:[%s4 + $0x18] sm:$0xff]
          %v1523 = vld [vmem:[%s4 + $0x20] sm:$0xff]
          %v1524 = vld [vmem:[%s4 + $0x28] sm:$0xff]
          %v1525 = vld [vmem:[%s4 + $0x30] sm:$0xff]
          %v1526 = vld [vmem:[%s4 + $0x38] sm:$0xff]
          %1528 = vset.pattern.permute.xlu0 0
          %1529 = vperm.xlu0 %1528, %v1519
          %v1530 = vpop.permute.xlu0 %1529
          %1533 = vset.pattern.permute.xlu0 0
          %1534 = vperm.xlu0 %1533, %v1520
          %v1535 = vpop.permute.xlu0 %1534
          %1538 = vset.pattern.permute.xlu0 0
          %1539 = vperm.xlu0 %1538, %v1521
          %v1540 = vpop.permute.xlu0 %1539
          %1543 = vset.pattern.permute.xlu0 0
          %1544 = vperm.xlu0 %1543, %v1522
          %v1545 = vpop.permute.xlu0 %1544
          %1548 = vset.pattern.permute.xlu0 0
          %1549 = vperm.xlu0 %1548, %v1523
          %v1550 = vpop.permute.xlu0 %1549
          %1553 = vset.pattern.permute.xlu0 0
          %1554 = vperm.xlu0 %1553, %v1524
          %v1555 = vpop.permute.xlu0 %1554
          %1558 = vset.pattern.permute.xlu0 0
          %1559 = vperm.xlu0 %1558, %v1525
          %v1560 = vpop.permute.xlu0 %1559
          %1563 = vset.pattern.permute.xlu0 0
          %1564 = vperm.xlu0 %1563, %v1526
          %v1565 = vpop.permute.xlu0 %1564
          %1567 = vmatprep.subr.mxu0 0.0
          %1568 = vmatpush1.msra.mxu0 %v1487
          %1569 = vmatprep.subr.mxu0 0.0
          %1570 = vmatpush1.msra.mxu0 %v1488
          %1571 = vmatprep.subr.mxu0 0.0
          %1572 = vmatpush1.msra.mxu0 %v1489
          %1573 = vmatprep.subr.mxu0 0.0
          %1574 = vmatpush1.msra.mxu0 %v1490
          %1575 = vmatprep.subr.mxu0 0.0
          %1576 = vmatpush1.msra.mxu0 %v1491
          %1577 = vmatprep.subr.mxu0 0.0
          %1578 = vmatpush1.msra.mxu0 %v1492
          %1579 = vmatprep.subr.mxu0 0.0
          %1580 = vmatpush1.msra.mxu0 %v1493
          %1581 = vmatprep.subr.mxu0 0.0
          %1582 = vmatpush1.msra.mxu0 %v1494
          %1583 = vmatprep.subr.mxu0 0.0
          %1584 = vmatpush1.msra.mxu0 %v1495
          %1585 = vmatprep.subr.mxu0 0.0
          %1586 = vmatpush1.msra.mxu0 %v1496
          %1587 = vmatprep.subr.mxu0 0.0
          %1588 = vmatpush1.msra.mxu0 %v1497
          %1589 = vmatprep.subr.mxu0 0.0
          %1590 = vmatpush1.msra.mxu0 %v1498
          %1591 = vmatprep.subr.mxu0 0.0
          %1592 = vmatpush1.msra.mxu0 %v1499
          %1593 = vmatprep.subr.mxu0 0.0
          %1594 = vmatpush1.msra.mxu0 %v1500
          %1595 = vmatprep.subr.mxu0 0.0
          %1596 = vmatpush1.msra.mxu0 %v1501
          %1597 = vmatprep.subr.mxu0 0.0
          %1598 = vmatpush1.msra.mxu0 %v1502
          %1599 = vmatprep.subr.mxu0 0.0
          %1600 = vmatpush1.msra.mxu0 %v1503
          %1601 = vmatprep.subr.mxu0 0.0
          %1602 = vmatpush1.msra.mxu0 %v1504
          %1603 = vmatprep.subr.mxu0 0.0
          %1604 = vmatpush1.msra.mxu0 %v1505
          %1605 = vmatprep.subr.mxu0 0.0
          %1606 = vmatpush1.msra.mxu0 %v1506
          %1607 = vmatprep.subr.mxu0 0.0
          %1608 = vmatpush1.msra.mxu0 %v1507
          %1609 = vmatprep.subr.mxu0 0.0
          %1610 = vmatpush1.msra.mxu0 %v1508
          %1611 = vmatprep.subr.mxu0 0.0
          %1612 = vmatpush1.msra.mxu0 %v1509
          %1613 = vmatprep.subr.mxu0 0.0
          %1614 = vmatpush1.msra.mxu0 %v1510
          %1615 = vmatprep.subr.mxu0 0.0
          %1616 = vmatpush1.msra.mxu0 %v1511
          %1617 = vmatprep.subr.mxu0 0.0
          %1618 = vmatpush1.msra.mxu0 %v1512
          %1619 = vmatprep.subr.mxu0 0.0
          %1620 = vmatpush1.msra.mxu0 %v1513
          %1621 = vmatprep.subr.mxu0 0.0
          %1622 = vmatpush1.msra.mxu0 %v1514
          %1623 = vmatprep.subr.mxu0 0.0
          %1624 = vmatpush1.msra.mxu0 %v1515
          %1625 = vmatprep.subr.mxu0 0.0
          %1626 = vmatpush1.msra.mxu0 %v1516
          %1627 = vmatprep.subr.mxu0 0.0
          %1628 = vmatpush1.msra.mxu0 %v1517
          %1629 = vmatprep.subr.mxu0 0.0
          %1630 = vmatpush1.msra.mxu0 %v1518
          %1631 = vmatprep.mubr.f32.mxu0 %v1472
          %1632 = vmatmul.mubr.f32.gmra.mrb[0].mxu0 %v1471
          %v1633 = vpop.f32.mrb[0].mxu0
          %v1634 = vadd.f32 %v1530, %v1633
          %v1635 = vpop.f32.mrb[0].mxu0
          %1636 = vmatprep.mubr.f32.mxu0 %v1474
          %1637 = vmatmul.mubr.f32.gmra.mrb[0].mxu0 %v1473
          %v1638 = vpop.f32.mrb[0].mxu0
          %v1639 = vadd.f32 %v1535, %v1638
          %v1640 = vpop.f32.mrb[0].mxu0
          %1641 = vmatprep.mubr.f32.mxu0 %v1476
          %1642 = vmatmul.mubr.f32.gmra.mrb[0].mxu0 %v1475
          %v1643 = vpop.f32.mrb[0].mxu0
          %v1644 = vadd.f32 %v1540, %v1643
          %v1645 = vpop.f32.mrb[0].mxu0
          %1646 = vmatprep.mubr.f32.mxu0 %v1478
          %1647 = vmatmul.mubr.f32.gmra.mrb[0].mxu0 %v1477
          %v1648 = vpop.f32.mrb[0].mxu0
          %v1649 = vadd.f32 %v1545, %v1648
          %v1650 = vpop.f32.mrb[0].mxu0
          %1651 = vmatprep.mubr.f32.mxu0 %v1480
          %1652 = vmatmul.mubr.f32.gmra.mrb[0].mxu0 %v1479
          %v1653 = vpop.f32.mrb[0].mxu0
          %v1654 = vadd.f32 %v1550, %v1653
          %v1655 = vpop.f32.mrb[0].mxu0
          %1656 = vmatprep.mubr.f32.mxu0 %v1482
          %1657 = vmatmul.mubr.f32.gmra.mrb[0].mxu0 %v1481
          %v1658 = vpop.f32.mrb[0].mxu0
          %v1659 = vadd.f32 %v1555, %v1658
          %v1660 = vpop.f32.mrb[0].mxu0
          %1661 = vmatprep.mubr.f32.mxu0 %v1484
          %1662 = vmatmul.mubr.f32.gmra.mrb[0].mxu0 %v1483
          %v1663 = vpop.f32.mrb[0].mxu0
          %v1664 = vadd.f32 %v1560, %v1663
          %v1665 = vpop.f32.mrb[0].mxu0
          %1666 = vmatprep.mubr.f32.mxu0 %v1486
          %1667 = vmatmul.mubr.f32.gmra.mrb[0].mxu0 %v1485
          %v1668 = vpop.f32.mrb[0].mxu0
          %v1669 = vadd.f32 %v1565, %v1668
          %v1670 = vpop.f32.mrb[0].mxu0
          %1671 = vdwg.mxu0
          %v1672 = vmax.f32 %v1634, 0.0
          %v1673 = vmax.f32 %v1639, 0.0
          %v1674 = vmax.f32 %v1644, 0.0
          %v1675 = vmax.f32 %v1649, 0.0
          %v1676 = vmax.f32 %v1654, 0.0
          %v1677 = vmax.f32 %v1659, 0.0
          %v1678 = vmax.f32 %v1664, 0.0
          %v1679 = vmax.f32 %v1669, 0.0
          %v1680 = vld [vmem:[#allocation10] sm:$0xff]
          %v1681 = vld [vmem:[#allocation10 + $0x8] sm:$0xff]
          %v1682 = vld [vmem:[#allocation10 + $0x10] sm:$0xff]
          %v1683 = vld [vmem:[#allocation10 + $0x18] sm:$0xff]
          %v1684 = vld [vmem:[%s6] sm:$0xff]
          %v1685 = vld [vmem:[%s6 + $0x8] sm:$0xff]
          %v1686 = vld [vmem:[%s6 + $0x10] sm:$0xff]
          %v1687 = vld [vmem:[%s6 + $0x18] sm:$0xff]
          %1689 = vset.pattern.permute.xlu0 0
          %1690 = vperm.xlu0 %1689, %v1684
          %v1691 = vpop.permute.xlu0 %1690
          %1694 = vset.pattern.permute.xlu0 0
          %1695 = vperm.xlu0 %1694, %v1685
          %v1696 = vpop.permute.xlu0 %1695
          %1699 = vset.pattern.permute.xlu0 0
          %1700 = vperm.xlu0 %1699, %v1686
          %v1701 = vpop.permute.xlu0 %1700
          %1704 = vset.pattern.permute.xlu0 0
          %1705 = vperm.xlu0 %1704, %v1687
          %v1706 = vpop.permute.xlu0 %1705
          %vm1708 = vcmask 523264
          %v1710 = vsel %vm1708, %v1680, 0
          %v1713 = vsel %vm1708, %v1681, 0
          %v1716 = vsel %vm1708, %v1682, 0
          %v1719 = vsel %vm1708, %v1683, 0
          %1721 = vmatprep.subr.mxu0 0.0
          %1722 = vmatpush1.msra.mxu0 %v1672
          %1723 = vmatprep.subr.mxu0 0.0
          %1724 = vmatpush1.msra.mxu0 %v1673
          %1725 = vmatprep.subr.mxu0 0.0
          %1726 = vmatpush1.msra.mxu0 %v1674
          %1727 = vmatprep.subr.mxu0 0.0
          %1728 = vmatpush1.msra.mxu0 %v1675
          %1729 = vmatprep.subr.mxu0 0.0
          %1730 = vmatpush1.msra.mxu0 %v1676
          %1731 = vmatprep.subr.mxu0 0.0
          %1732 = vmatpush1.msra.mxu0 %v1677
          %1733 = vmatprep.subr.mxu0 0.0
          %1734 = vmatpush1.msra.mxu0 %v1678
          %1735 = vmatprep.subr.mxu0 0.0
          %1736 = vmatpush1.msra.mxu0 %v1679
          %1737 = vmatprep.subr.mxu0 0.0
          %1738 = vmatpush1.msra.mxu0 0.0
          %1739 = vmatprep.subr.mxu0 0.0
          %1740 = vmatpush1.msra.mxu0 0.0
          %1741 = vmatprep.subr.mxu0 0.0
          %1742 = vmatpush1.msra.mxu0 0.0
          %1743 = vmatprep.subr.mxu0 0.0
          %1744 = vmatpush1.msra.mxu0 0.0
          %1745 = vmatprep.subr.mxu0 0.0
          %1746 = vmatpush1.msra.mxu0 0.0
          %1747 = vmatprep.subr.mxu0 0.0
          %1748 = vmatpush1.msra.mxu0 0.0
          %1749 = vmatprep.subr.mxu0 0.0
          %1750 = vmatpush1.msra.mxu0 0.0
          %1751 = vmatprep.subr.mxu0 0.0
          %1752 = vmatpush1.msra.mxu0 0.0
          %1753 = vmatprep.subr.mxu0 0.0
          %1754 = vmatpush1.msra.mxu0 0.0
          %1755 = vmatprep.subr.mxu0 0.0
          %1756 = vmatpush1.msra.mxu0 0.0
          %1757 = vmatprep.subr.mxu0 0.0
          %1758 = vmatpush1.msra.mxu0 0.0
          %1759 = vmatprep.subr.mxu0 0.0
          %1760 = vmatpush1.msra.mxu0 0.0
          %1761 = vmatprep.subr.mxu0 0.0
          %1762 = vmatpush1.msra.mxu0 0.0
          %1763 = vmatprep.subr.mxu0 0.0
          %1764 = vmatpush1.msra.mxu0 0.0
          %1765 = vmatprep.subr.mxu0 0.0
          %1766 = vmatpush1.msra.mxu0 0.0
          %1767 = vmatprep.subr.mxu0 0.0
          %1768 = vmatpush1.msra.mxu0 0.0
          %1769 = vmatprep.subr.mxu0 0.0
          %1770 = vmatpush1.msra.mxu0 0.0
          %1771 = vmatprep.subr.mxu0 0.0
          %1772 = vmatpush1.msra.mxu0 0.0
          %1773 = vmatprep.subr.mxu0 0.0
          %1774 = vmatpush1.msra.mxu0 0.0
          %1775 = vmatprep.subr.mxu0 0.0
          %1776 = vmatpush1.msra.mxu0 0.0
          %1777 = vmatprep.subr.mxu0 0.0
          %1778 = vmatpush1.msra.mxu0 0.0
          %1779 = vmatprep.subr.mxu0 0.0
          %1780 = vmatpush1.msra.mxu0 0.0
          %1781 = vmatprep.subr.mxu0 0.0
          %1782 = vmatpush1.msra.mxu0 0.0
          %1783 = vmatprep.subr.mxu0 0.0
          %1784 = vmatpush1.msra.mxu0 0.0
          %1785 = vmatprep.mubr.f32.mxu0 0.0
          %1786 = vmatmul.mubr.f32.gmra.mrb[0].mxu0 %v1710
          %v1787 = vpop.f32.mrb[0].mxu0
          %v1788 = vadd.f32 %v1691, %v1787
          %v1789 = vpop.f32.mrb[0].mxu0
          %1790 = vmatprep.mubr.f32.mxu0 0.0
          %1791 = vmatmul.mubr.f32.gmra.mrb[0].mxu0 %v1713
          %v1792 = vpop.f32.mrb[0].mxu0
          %v1793 = vadd.f32 %v1696, %v1792
          %v1794 = vpop.f32.mrb[0].mxu0
          %1795 = vmatprep.mubr.f32.mxu0 0.0
          %1796 = vmatmul.mubr.f32.gmra.mrb[0].mxu0 %v1716
          %v1797 = vpop.f32.mrb[0].mxu0
          %v1798 = vadd.f32 %v1701, %v1797
          %v1799 = vpop.f32.mrb[0].mxu0
          %1800 = vmatprep.mubr.f32.mxu0 0.0
          %1801 = vmatmul.mubr.f32.gmra.mrb[0].mxu0 %v1719
          %v1802 = vpop.f32.mrb[0].mxu0
          %v1803 = vadd.f32 %v1706, %v1802
          %v1804 = vpop.f32.mrb[0].mxu0
          %1805 = vdwg.mxu0
          %v1806 = vmax.f32 %v1788, 0.0
          %v1807 = vmax.f32 %v1793, 0.0
          %v1808 = vmax.f32 %v1798, 0.0
          %v1809 = vmax.f32 %v1803, 0.0
          %s1810 = sadd.s32 %s1160, 2
          %1815 = vrot.lane.b32.xlu0 %v1806, 2
          %v1816 = vpop.permute.xlu0 %1815
          %1817 = vrot.lane.b32.xlu0 %v1807, 2
          %v1818 = vpop.permute.xlu0 %1817
          %1819 = vrot.lane.b32.xlu0 %v1808, 2
          %v1820 = vpop.permute.xlu0 %1819
          %1821 = vrot.lane.b32.xlu0 %v1809, 2
          %v1822 = vpop.permute.xlu0 %1821
          %s1827 = smul.u32 %s1810, 32
          %s1828 = scalar_lea.vmem %s340, %s1827 [#allocation12]
          %vm1829 = vcmask 277520
          %1830 = vst.msk [vmem:[%s1828] sm:$0xff] %vm1829, %v1816
          %1831 = vst.msk [vmem:[%s1828 + $0x8] sm:$0xff] %vm1829, %v1818
          %1832 = vst.msk [vmem:[%s1828 + $0x10] sm:$0xff] %vm1829, %v1820
          %1833 = vst.msk [vmem:[%s1828 + $0x18] sm:$0xff] %vm1829, %v1822
        $region69: #{tpu_custom_call.1} parent=47 // loop_footer
          %s1164 = sadd.s32 1, %s1160
        $region70: #{tpu_custom_call.1} parent=47 // loop_footer_branch
          %1159 = sbr.rel target = $region66
        $region71: #{tpu_custom_call.1} parent=47 // loop_exit
          _
        %s1834 = sand.u32 %s186, 1
        %s1835 = scalar_lea.sflag [#allocation6], %s1834
        %s1836 = sand.u32 %s186, 1
        %s1837 = smul.addr %s1836, 1152
        %s1838 = scalar_lea.vmem [#allocation12], %s1837
        // Predicated region
        $region72: #{tpu_custom_call.1} parent=47 // pred_check
          %p1839 = pneg %p196
        $region73: #{tpu_custom_call.1} parent=47 // pred_check_branch
          %1841 = sbr.rel (%p1839) target = $region75
        $region74: #{tpu_custom_call.1} parent=47 // pred_region
          %s1843 = ssub.s32 18432, 18432
          %1844 = vsyncadd %s1835, %s1843
          %s1845 = smul.addr %s26, 144
          %s1846 = smul.addr %s1845, 128
          %s1847 = scalar_lea.hbm %s7, %s1846
          %s1848 = sshll.u32 %s1838, 4
          %s1849 = int_to_ptr.vmem [resolvable:$true] %s1848
          %1854 = dma.vmem_to_hbm [thread:$0]  %s1849, 18432, %s1847, %s1835, 128, 128, 8
        $region75: #{tpu_custom_call.1} parent=47 // pred_fallthru
          _
      $region48: #{tpu_custom_call.1} parent=5 // pred_fallthru
        _
      %p1855 = scmp.le.s32.totalorder 2, %s21
      // Predicated region
      $region76: #{tpu_custom_call.1} parent=5 // pred_check
        %p1856 = pneg %p1855
      $region77: #{tpu_custom_call.1} parent=5 // pred_check_branch
        %1858 = sbr.rel (%p1856) target = $region79
      $region78: #{tpu_custom_call.1} parent=5 // pred_region
        %s1859 = ssub.s32 %s21, 2
        // Predicated region
        $region80: #{tpu_custom_call.1} parent=78 // pred_check
          %p1860 = pneg %p202
        $region81: #{tpu_custom_call.1} parent=78 // pred_check_branch
          %1862 = sbr.rel (%p1860) target = $region83
        $region82: #{tpu_custom_call.1} parent=78 // pred_region
          %s1863 = sand.u32 %s187, 1
          %s1864 = scalar_lea.sflag [#allocation6], %s1863
          %s1865 = sand.u32 %s187, 1
          %s1866 = smul.addr %s1865, 1152
          %s1867 = scalar_lea.vmem [#allocation12], %s1866
          %1868 = dma.done %s1864, 18432
        $region83: #{tpu_custom_call.1} parent=78 // pred_fallthru
          _
      $region79: #{tpu_custom_call.1} parent=5 // pred_fallthru
        _
    $region6: #{tpu_custom_call.1} parent=1 // loop_footer
      %s25 = sadd.s32 1, %s21
    $region7: #{tpu_custom_call.1} parent=1 // loop_footer_branch
      %20 = sbr.rel target = $region3
    $region8: #{tpu_custom_call.1} parent=1 // loop_exit
      _
    %1869 = vsyncpa [#allocation5], 1
    %s1870 = scalar_lea.sflag [#allocation5], 1
    %1871 = vsyncpa %s1870, 1
    %1872 = vsyncpa [#allocation8], 1
    %1873 = vsyncpa [#allocation11], 1
    %1874 = vsyncpa [#allocation6], 1
    %s1875 = scalar_lea.sflag [#allocation6], 1
    %1876 = vsyncpa %s1875, 1

</llo_original>
